<compile_context>
chip_gen: v7x
topology: tpu7x:2x2x1
jax: 0.10.0
libtpu: 0.0.40
codegen_flags: <defaults>
</compile_context>

<pallas_src>
import jax
import jax.numpy as jnp
from jax.experimental import pallas as pl
from jax.experimental.pallas import tpu as pltpu

HIDDEN_SIZE = 512
INPUT_SIZE = 5
# output_size = len(lower) comes from the external surrogate's domain; we fix
# a small synthetic value here.
OUTPUT_SIZE = 4

SUBLANE = 8
NUM_STACKED = 7  # hidden layers 2..8


def _mlp_kernel(x_ref, w1_ref, b1_ref, ws_ref, bs_ref, w9_ref, b9_ref,
                out_ref, h_ref):
    """Grid axis = stacked hidden-layer index (7 steps).

    step 0       : h = relu(x @ w1 + b1)                    (prologue, layer 1)
    every step l : h = relu(h @ w_stack[l] + b_stack[l])    (layers 2..8)
    last step    : out = h @ w9 + b9                        (epilogue, output)
    """
    l = pl.program_id(0)

    @pl.when(l == 0)
    def _():
        h0 = jnp.dot(x_ref[...], w1_ref[...],
                     preferred_element_type=jnp.float32)
        h_ref[...] = jnp.maximum(h0 + b1_ref[...], 0.0).astype(h_ref.dtype)

    # ws_ref / bs_ref are squeezed to (512, 512) / (1, 512) for this step.
    h = jnp.dot(h_ref[...], ws_ref[...], preferred_element_type=jnp.float32)
    h_ref[...] = jnp.maximum(h + bs_ref[...], 0.0).astype(h_ref.dtype)

    @pl.when(l == pl.num_programs(0) - 1)
    def _():
        out = jnp.dot(h_ref[...], w9_ref[...],
                      preferred_element_type=jnp.float32)
        out_ref[...] = (out + b9_ref[...]).astype(out_ref.dtype)


def _pad_to(a, shape):
    return jnp.pad(a, [(0, t - s) for s, t in zip(a.shape, shape)])


def prepare_params(params, input_size=INPUT_SIZE):
    """One-time weight prep (kept OUT of the per-call path): bf16 cast,
    minimal sublane padding of the ragged contraction dim, and stacking of the
    seven hidden layers for grid streaming.  Biases stay f32 (tiny, post-MXU
    add in the f32 accumulator)."""
    in_pad = max(SUBLANE, ((input_size + SUBLANE - 1) // SUBLANE) * SUBLANE)
    w1 = _pad_to(params["w1"].astype(jnp.bfloat16), (in_pad, HIDDEN_SIZE))
    w_stack = jnp.stack(
        [params[f"w{i}"] for i in range(2, 2 + NUM_STACKED)]).astype(jnp.bfloat16)
    b_stack = jnp.stack(
        [params[f"b{i}"] for i in range(2, 2 + NUM_STACKED)]).astype(jnp.float32)
    return {
        "w1": w1,                                          # (in_pad, 512) bf16
        "b1": params["b1"].astype(jnp.float32),            # (1, 512) f32
        "w_stack": w_stack,                                # (7, 512, 512) bf16
        "b_stack": b_stack,                                # (7, 1, 512) f32
        "w9": params["w9"].astype(jnp.bfloat16),           # (512, out) bf16
        "b9": params["b9"].astype(jnp.float32),            # (1, out) f32
    }


@jax.jit
def backward_model_forward(x, prep):
    """x: (B, input_size) float32; prep: output of prepare_params()."""
    B = x.shape[0]
    in_pad = prep["w1"].shape[0]
    out_dim = prep["w9"].shape[1]
    B_pad = max(SUBLANE, ((B + SUBLANE - 1) // SUBLANE) * SUBLANE)

    # Per-call padding only touches the tiny activation (cheap, fused by XLA);
    # all weights were padded / cast once in prepare_params.
    x_p = _pad_to(x.astype(jnp.bfloat16), (B_pad, in_pad))

    grid_spec = pltpu.PrefetchScalarGridSpec(
        num_scalar_prefetch=0,
        grid=(NUM_STACKED,),
        in_specs=[
            pl.BlockSpec((B_pad, in_pad), lambda l: (0, 0)),              # x
            pl.BlockSpec((in_pad, HIDDEN_SIZE), lambda l: (0, 0)),        # w1
            pl.BlockSpec((1, HIDDEN_SIZE), lambda l: (0, 0)),             # b1
            pl.BlockSpec((None, HIDDEN_SIZE, HIDDEN_SIZE),
                         lambda l: (l, 0, 0)),                            # w2..w8 (streamed)
            pl.BlockSpec((None, 1, HIDDEN_SIZE), lambda l: (l, 0, 0)),    # b2..b8 (streamed)
            pl.BlockSpec((HIDDEN_SIZE, out_dim), lambda l: (0, 0)),       # w9
            pl.BlockSpec((1, out_dim), lambda l: (0, 0)),                 # b9
        ],
        out_specs=pl.BlockSpec((B_pad, out_dim), lambda l: (0, 0)),
        scratch_shapes=[pltpu.VMEM((B_pad, HIDDEN_SIZE), jnp.bfloat16)],
    )

    # Advisory cost hint for XLA scheduling around the custom call.
    flops = 2 * B_pad * (in_pad * HIDDEN_SIZE
                         + NUM_STACKED * HIDDEN_SIZE * HIDDEN_SIZE
                         + HIDDEN_SIZE * out_dim)
    bytes_accessed = (
        2 * (in_pad * HIDDEN_SIZE
             + NUM_STACKED * HIDDEN_SIZE * HIDDEN_SIZE
             + HIDDEN_SIZE * out_dim)                       # bf16 weights
        + 4 * (NUM_STACKED + 1) * HIDDEN_SIZE + 4 * out_dim  # f32 biases
        + 2 * B_pad * in_pad + 4 * B_pad * out_dim)           # activations
    cost = pl.CostEstimate(flops=flops, transcendentals=0,
                           bytes_accessed=bytes_accessed)

    y_p = pl.pallas_call(
        _mlp_kernel,
        out_shape=jax.ShapeDtypeStruct((B_pad, out_dim), jnp.float32),
        grid_spec=grid_spec,
        compiler_params=pltpu.CompilerParams(
            dimension_semantics=("arbitrary",),   # sequential carry across layers
            vmem_limit_bytes=16 << 20,
        ),
        cost_estimate=cost,
    )(x_p, prep["w1"], prep["b1"], prep["w_stack"], prep["b_stack"],
      prep["w9"], prep["b9"])

    return y_p[:B]


def init_params(key, input_size=INPUT_SIZE, hidden_size=HIDDEN_SIZE,
                output_size=OUTPUT_SIZE):
    """Deterministic PyTorch-style (Kaiming-uniform-ish) init, f32."""
    dims = [(input_size, hidden_size)] + \
           [(hidden_size, hidden_size)] * 7 + \
           [(hidden_size, output_size)]
    params = {}
    for i, (fan_in, fan_out) in enumerate(dims, start=1):
        key, kw, kb = jax.random.split(key, 3)
        bound = 1.0 / jnp.sqrt(fan_in)
        params[f"w{i}"] = jax.random.uniform(
            kw, (fan_in, fan_out), jnp.float32, -bound, bound)
        params[f"b{i}"] = jax.random.uniform(
            kb, (1, fan_out), jnp.float32, -bound, bound)
    return params


def _reference_forward(x, prep):
    """Pure-JAX reference with the same numerics as the kernel:
    bf16 weights/activations, f32 accumulation, f32 biases."""
    in_dim = x.shape[1]
    h = jnp.maximum(
        jnp.dot(x.astype(jnp.bfloat16), prep["w1"][:in_dim],
                preferred_element_type=jnp.float32) + prep["b1"], 0.0)
    for i in range(prep["w_stack"].shape[0]):
        h = jnp.maximum(
            jnp.dot(h.astype(jnp.bfloat16), prep["w_stack"][i],
                    preferred_element_type=jnp.float32) + prep["b_stack"][i],
            0.0)
    return jnp.dot(h.astype(jnp.bfloat16), prep["w9"],
                   preferred_element_type=jnp.float32) + prep["b9"]


if __name__ == "__main__":
    key = jax.random.PRNGKey(0)
    k_params, k_x = jax.random.split(key)
    params = init_params(k_params)
    prep = prepare_params(params)   # one-time pad/cast/stack, outside hot path

    batch = 2
    x = jax.random.normal(k_x, (batch, INPUT_SIZE), jnp.float32)

    y = backward_model_forward(x, prep)
    y = jax.block_until_ready(y)

    y_ref = _reference_forward(x, prep)
    assert y.shape == (batch, OUTPUT_SIZE), y.shape
    max_err = float(jnp.max(jnp.abs(y - y_ref)))
    assert jnp.allclose(y, y_ref, atol=1e-2, rtol=1e-2), max_err

    print("KERNEL_OK")
</pallas_src>

<mosaic_0001>
module attributes {stable_mosaic.version = 11 : i64} {
  func.func @_mlp_kernel(%arg0: i32, %arg1: memref<8x8xbf16, #tpu.memory_space<vmem>>, %arg2: memref<8x512xbf16, #tpu.memory_space<vmem>>, %arg3: memref<1x512xf32, #tpu.memory_space<vmem>>, %arg4: memref<1x512x512xbf16, #tpu.memory_space<vmem>>, %arg5: memref<1x1x512xf32, #tpu.memory_space<vmem>>, %arg6: memref<512x4xbf16, #tpu.memory_space<vmem>>, %arg7: memref<1x4xf32, #tpu.memory_space<vmem>>, %arg8: memref<8x4xf32, #tpu.memory_space<vmem>>, %arg9: memref<8x512xbf16, #tpu.memory_space<vmem>>) attributes {dimension_semantics = [#tpu.dimension_semantics<arbitrary>], iteration_bounds = array<i64: 7>, scalar_prefetch = 0 : i64, scratch_operands = 1 : i64, tpu.core_type = #tpu.core_type<tc>, window_params = [{pipeline_mode = #tpu.pipeline_mode<synchronous>, transform_indices = @transform_0, window_bounds = array<i64: 8, 8>}, {pipeline_mode = #tpu.pipeline_mode<synchronous>, transform_indices = @transform_1, window_bounds = array<i64: 8, 512>}, {pipeline_mode = #tpu.pipeline_mode<synchronous>, transform_indices = @transform_2, window_bounds = array<i64: 1, 512>}, {transform_indices = @transform_3, window_bounds = array<i64: 1, 512, 512>}, {transform_indices = @transform_4, window_bounds = array<i64: 1, 1, 512>}, {pipeline_mode = #tpu.pipeline_mode<synchronous>, transform_indices = @transform_5, window_bounds = array<i64: 512, 4>}, {pipeline_mode = #tpu.pipeline_mode<synchronous>, transform_indices = @transform_6, window_bounds = array<i64: 1, 4>}, {pipeline_mode = #tpu.pipeline_mode<synchronous>, transform_indices = @transform_7, window_bounds = array<i64: 8, 4>}]} {
    %c0_i32 = arith.constant 0 : i32
    %0 = arith.cmpi eq, %arg0, %c0_i32 : i32
    %1 = arith.extui %0 : i1 to i32
    %c0_i32_0 = arith.constant 0 : i32
    %2 = arith.cmpi ne, %1, %c0_i32_0 : i32
    scf.if %2 {
      %c0_12 = arith.constant 0 : index
      %c0_13 = arith.constant 0 : index
      %18 = vector.load %arg1[%c0_12, %c0_13] : memref<8x8xbf16, #tpu.memory_space<vmem>>, vector<8x8xbf16>
      %c0_14 = arith.constant 0 : index
      %c0_15 = arith.constant 0 : index
      %19 = vector.load %arg2[%c0_14, %c0_15] : memref<8x512xbf16, #tpu.memory_space<vmem>>, vector<8x512xbf16>
      %cst_16 = arith.constant dense<0.000000e+00> : vector<8x512xf32>
      %20 = tpu.matmul %18, %19, %cst_16 {dimension_numbers = #tpu.dot_dimension_numbers<[1], [0], [0], [1], [0, 0, 1, 1], [], []>} : vector<8x8xbf16>, vector<8x512xbf16>, vector<8x512xf32> -> vector<8x512xf32>
      %c0_17 = arith.constant 0 : index
      %c0_18 = arith.constant 0 : index
      %21 = vector.load %arg3[%c0_17, %c0_18] : memref<1x512xf32, #tpu.memory_space<vmem>>, vector<1x512xf32>
      %22 = vector.broadcast %21 : vector<1x512xf32> to vector<8x512xf32>
      %23 = arith.addf %20, %22 : vector<8x512xf32>
      %cst_19 = arith.constant 0.000000e+00 : f32
      %24 = vector.broadcast %cst_19 : f32 to vector<8x512xf32>
      %25 = arith.maximumf %23, %24 : vector<8x512xf32>
      %26 = arith.truncf %25 : vector<8x512xf32> to vector<8x512xbf16>
      %c0_20 = arith.constant 0 : index
      %c0_21 = arith.constant 0 : index
      %27 = vector.load %arg9[%c0_20, %c0_21] : memref<8x512xbf16, #tpu.memory_space<vmem>>, vector<8x512xbf16>
      tpu.vector_store %arg9[%c0_20, %c0_21], %26 {strides = array<i32>} : memref<8x512xbf16, #tpu.memory_space<vmem>>, vector<8x512xbf16>,
    } else {
    }
    %c0 = arith.constant 0 : index
    %c0_1 = arith.constant 0 : index
    %3 = vector.load %arg9[%c0, %c0_1] : memref<8x512xbf16, #tpu.memory_space<vmem>>, vector<8x512xbf16>
    %c0_2 = arith.constant 0 : index
    %c0_3 = arith.constant 0 : index
    %c0_4 = arith.constant 0 : index
    %4 = vector.load %arg4[%c0_2, %c0_3, %c0_4] : memref<1x512x512xbf16, #tpu.memory_space<vmem>>, vector<1x512x512xbf16>
    %5 = vector.shape_cast %4 : vector<1x512x512xbf16> to vector<512x512xbf16>
    %cst = arith.constant dense<0.000000e+00> : vector<8x512xf32>
    %6 = tpu.matmul %3, %5, %cst {dimension_numbers = #tpu.dot_dimension_numbers<[1], [0], [0], [1], [0, 0, 1, 1], [], []>} : vector<8x512xbf16>, vector<512x512xbf16>, vector<8x512xf32> -> vector<8x512xf32>
    %c0_5 = arith.constant 0 : index
    %c0_6 = arith.constant 0 : index
    %c0_7 = arith.constant 0 : index
    %7 = vector.load %arg5[%c0_5, %c0_6, %c0_7] : memref<1x1x512xf32, #tpu.memory_space<vmem>>, vector<1x1x512xf32>
    %8 = vector.shape_cast %7 : vector<1x1x512xf32> to vector<1x512xf32>
    %9 = vector.broadcast %8 : vector<1x512xf32> to vector<8x512xf32>
    %10 = arith.addf %6, %9 : vector<8x512xf32>
    %cst_8 = arith.constant 0.000000e+00 : f32
    %11 = vector.broadcast %cst_8 : f32 to vector<8x512xf32>
    %12 = arith.maximumf %10, %11 : vector<8x512xf32>
    %13 = arith.truncf %12 : vector<8x512xf32> to vector<8x512xbf16>
    %c0_9 = arith.constant 0 : index
    %c0_10 = arith.constant 0 : index
    %14 = vector.load %arg9[%c0_9, %c0_10] : memref<8x512xbf16, #tpu.memory_space<vmem>>, vector<8x512xbf16>
    tpu.vector_store %arg9[%c0_9, %c0_10], %13 {strides = array<i32>} : memref<8x512xbf16, #tpu.memory_space<vmem>>, vector<8x512xbf16>,
    %c6_i32 = arith.constant 6 : i32
    %15 = arith.cmpi eq, %arg0, %c6_i32 : i32
    %16 = arith.extui %15 : i1 to i32
    %c0_i32_11 = arith.constant 0 : i32
    %17 = arith.cmpi ne, %16, %c0_i32_11 : i32
    scf.if %17 {
      %c0_12 = arith.constant 0 : index
      %c0_13 = arith.constant 0 : index
      %18 = vector.load %arg9[%c0_12, %c0_13] : memref<8x512xbf16, #tpu.memory_space<vmem>>, vector<8x512xbf16>
      %c0_14 = arith.constant 0 : index
      %c0_15 = arith.constant 0 : index
      %19 = vector.load %arg6[%c0_14, %c0_15] : memref<512x4xbf16, #tpu.memory_space<vmem>>, vector<512x4xbf16>
      %cst_16 = arith.constant dense<0.000000e+00> : vector<8x4xf32>
      %20 = tpu.matmul %18, %19, %cst_16 {dimension_numbers = #tpu.dot_dimension_numbers<[1], [0], [0], [1], [0, 0, 1, 1], [], []>} : vector<8x512xbf16>, vector<512x4xbf16>, vector<8x4xf32> -> vector<8x4xf32>
      %c0_17 = arith.constant 0 : index
      %c0_18 = arith.constant 0 : index
      %21 = vector.load %arg7[%c0_17, %c0_18] : memref<1x4xf32, #tpu.memory_space<vmem>>, vector<1x4xf32>
      %22 = vector.broadcast %21 : vector<1x4xf32> to vector<8x4xf32>
      %23 = arith.addf %20, %22 : vector<8x4xf32>
      %c0_19 = arith.constant 0 : index
      %c0_20 = arith.constant 0 : index
      %24 = vector.load %arg8[%c0_19, %c0_20] : memref<8x4xf32, #tpu.memory_space<vmem>>, vector<8x4xf32>
      tpu.vector_store %arg8[%c0_19, %c0_20], %23 {strides = array<i32>} : memref<8x4xf32, #tpu.memory_space<vmem>>, vector<8x4xf32>,
    } else {
    }
    return
  }
  func.func @transform_0(%arg0: i32) -> (i32, i32) {
    %c0_i32 = arith.constant 0 : i32
    %c0_i32_0 = arith.constant 0 : i32
    %c0_i32_1 = arith.constant 0 : i32
    return %c0_i32, %c0_i32_0 : i32, i32
  }
  func.func @transform_1(%arg0: i32) -> (i32, i32) {
    %c0_i32 = arith.constant 0 : i32
    %c0_i32_0 = arith.constant 0 : i32
    %c0_i32_1 = arith.constant 0 : i32
    return %c0_i32, %c0_i32_0 : i32, i32
  }
  func.func @transform_2(%arg0: i32) -> (i32, i32) {
    %c0_i32 = arith.constant 0 : i32
    %c0_i32_0 = arith.constant 0 : i32
    %c0_i32_1 = arith.constant 0 : i32
    return %c0_i32, %c0_i32_0 : i32, i32
  }
  func.func @transform_3(%arg0: i32) -> (i32, i32, i32) {
    %c0_i32 = arith.constant 0 : i32
    %c0_i32_0 = arith.constant 0 : i32
    %c0_i32_1 = arith.constant 0 : i32
    return %arg0, %c0_i32, %c0_i32_0 : i32, i32, i32
  }
  func.func @transform_4(%arg0: i32) -> (i32, i32, i32) {
    %c0_i32 = arith.constant 0 : i32
    %c0_i32_0 = arith.constant 0 : i32
    %c0_i32_1 = arith.constant 0 : i32
    return %arg0, %c0_i32, %c0_i32_0 : i32, i32, i32
  }
  func.func @transform_5(%arg0: i32) -> (i32, i32) {
    %c0_i32 = arith.constant 0 : i32
    %c0_i32_0 = arith.constant 0 : i32
    %c0_i32_1 = arith.constant 0 : i32
    return %c0_i32, %c0_i32_0 : i32, i32
  }
  func.func @transform_6(%arg0: i32) -> (i32, i32) {
    %c0_i32 = arith.constant 0 : i32
    %c0_i32_0 = arith.constant 0 : i32
    %c0_i32_1 = arith.constant 0 : i32
    return %c0_i32, %c0_i32_0 : i32, i32
  }
  func.func @transform_7(%arg0: i32) -> (i32, i32) {
    %c0_i32 = arith.constant 0 : i32
    %c0_i32_0 = arith.constant 0 : i32
    %c0_i32_1 = arith.constant 0 : i32
    return %c0_i32, %c0_i32_0 : i32, i32
  }
}

</mosaic_0001>

<llo_original>
// kernel: backward_model_forward.1
$region0: #{backward_model_forward.1}
  #allocation0 [shape = 'u32[]', space=smem, size = 0x4, offset = 0x4, fixed_abs, tag = 'smem constant byte address 0x4 - core index']
  #allocation1 [shape = 'u32[144,128]{1,0:T(1,128)}', space=vmem, size = 0x12000, scoped, tag = 'internal scratch']
  #allocation2 [shape = 'bf16[8,512]{1,0:T(8,128)(2,1)}', space=vmem, size = 0x2000, scoped, tag = 'scratch operand']
  %s0 = inlined_call_operand.vmem [shape: bf16[8,8], index: 0, kind: input, shape index: {}]
  %s1 = inlined_call_operand.hbm [shape: bf16[8,512], index: 1, kind: input, shape index: {}]
  %s2 = inlined_call_operand.hbm [shape: f32[1,512], index: 2, kind: input, shape index: {}]
  %s3 = inlined_call_operand.hbm [shape: bf16[7,512,512], index: 3, kind: input, shape index: {}]
  %s4 = inlined_call_operand.hbm [shape: f32[7,1,512], index: 4, kind: input, shape index: {}]
  %s5 = inlined_call_operand.vmem [shape: bf16[512,4], index: 5, kind: input, shape index: {}]
  %s6 = inlined_call_operand.hbm [shape: f32[1,4], index: 6, kind: input, shape index: {}]
  %s7 = inlined_call_operand.vmem [shape: f32[8,4], index: 7, kind: output, shape index: {}]
  %s8 = sld [smem:[#allocation0]]
  $region89: #{backward_model_forward.1} parent=0
    _
  %s10 = ssub.s32 1, %s8
  %s11 = scalar_select 0, %s10, %s8
  $region1: #{backward_model_forward.1} parent=0
    #allocation3 [shape = 'u8[8192]{0}', space=vmem, size = 0x2000, scoped, tag = 'input window, operand 1, single buffered']
    #allocation4 [shape = 's32[2]{0}', space=sflag, size = 0x8, scoped, tag = 'scoped memory for backward_model_forward.1']
    #allocation5 [shape = 'u8[2048]{0}', space=vmem, size = 0x800, scoped, tag = 'input window, operand 2, single buffered']
    #allocation6 [shape = 's32[1]{0}', space=sflag, size = 0x4, scoped, tag = 'scoped memory for backward_model_forward.1']
    #allocation7 [shape = 'u8[1048576]{0}', space=vmem, size = 0x100000, scoped, tag = 'input window, operand 3']
    #allocation8 [shape = 'u8[4096]{0}', space=vmem, size = 0x1000, scoped, tag = 'input window, operand 4']
    #allocation9 [shape = 'u8[512]{0}', space=vmem, size = 0x400, scoped, tag = 'input window, operand 6, single buffered']
    %12 = vsyncpa [#allocation4], 0
    %13 = vsyncpa [#allocation6], 0
    loop: start=0, step=1, limit=9
    $region2: #{backward_model_forward.1} parent=1 // loop_pre_header
      _
    $region3: #{backward_model_forward.1} parent=1 // loop_header
      %s15 = sphi 0, %s19
      %p16 = scmp.ge.s32.totalorder %s15, 9
      %s23 = sphi 0, %s23
      %s25 = sphi 0, %s23
      %s26 = sphi 0, %s25
      %s40 = sphi 0, %s26
      %s44 = sphi 0, %s44
      %s46 = sphi 0, %s44
      %s47 = sphi 0, %s46
      %s61 = sphi 0, %s47
      %s65 = sphi 0, %s65
      %s67 = sphi 0, %s65
      %s68 = sphi 0, %s67
      %s82 = sphi 0, %s68
      %s88 = sphi 0, %s90
      %s91 = sphi 0, %s88
      %s92 = sphi 0, %s91
      %s108 = sphi 0, %s92
      %s114 = sphi 0, %s116
      %s117 = sphi 0, %s114
      %s118 = sphi 0, %s117
      %s134 = sphi 0, %s118
      %s138 = sphi 0, %s138
      %s140 = sphi 0, %s138
      %s141 = sphi 0, %s140
      %s155 = sphi 0, %s141
      %s159 = sphi 0, %s159
      %s161 = sphi 0, %s159
      %s162 = sphi 0, %s161
      %s176 = sphi 0, %s162
      %s180 = sphi 0, %s180
      %s182 = sphi 0, %s180
      %s183 = sphi 0, %s182
      %s197 = sphi 0, %s183
    $region4: #{backward_model_forward.1} parent=1 // loop_header_branch
      %18 = sbr.rel (%p16) target = $region8
    $region5: #{backward_model_forward.1} parent=1 // loop_body
      %s20 = ssub.s32 %s15, 1
      %s21 = ssub.s32 %s15, 2
      %s22 = sadd.s32 %s15, 1
      %s24 = sadd.s32 %s23, 1
      %p27 = scmp.eq.s32.totalorder %s15, 6
      %p28 = scmp.ne.s32.totalorder %s23, %s25
      %p29 = scmp.eq.s32.totalorder %s15, 0
      %p30 = por %p28, %p29
      %p31 = scmp.ne.s32.totalorder %s23, %s25
      %p32 = scmp.eq.s32.totalorder %s20, 6
      %p33 = por %p31, %p32
      %p34 = scmp.ne.s32.totalorder %s25, %s26
      %p35 = scmp.eq.s32.totalorder %s20, 0
      %p36 = por %p34, %p35
      %p37 = scmp.ne.s32.totalorder %s25, %s26
      %p38 = scmp.eq.s32.totalorder %s21, 6
      %p39 = por %p37, %p38
      %p41 = scmp.ne.s32.totalorder %s26, %s40
      %p42 = scmp.eq.s32.totalorder %s21, 0
      %p43 = por %p41, %p42
      %s45 = sadd.s32 %s44, 1
      %p48 = scmp.eq.s32.totalorder %s15, 6
      %p49 = scmp.ne.s32.totalorder %s44, %s46
      %p50 = scmp.eq.s32.totalorder %s15, 0
      %p51 = por %p49, %p50
      %p52 = scmp.ne.s32.totalorder %s44, %s46
      %p53 = scmp.eq.s32.totalorder %s20, 6
      %p54 = por %p52, %p53
      %p55 = scmp.ne.s32.totalorder %s46, %s47
      %p56 = scmp.eq.s32.totalorder %s20, 0
      %p57 = por %p55, %p56
      %p58 = scmp.ne.s32.totalorder %s46, %s47
      %p59 = scmp.eq.s32.totalorder %s21, 6
      %p60 = por %p58, %p59
      %p62 = scmp.ne.s32.totalorder %s47, %s61
      %p63 = scmp.eq.s32.totalorder %s21, 0
      %p64 = por %p62, %p63
      %s66 = sadd.s32 %s65, 1
      %p69 = scmp.eq.s32.totalorder %s15, 6
      %p70 = scmp.ne.s32.totalorder %s65, %s67
      %p71 = scmp.eq.s32.totalorder %s15, 0
      %p72 = por %p70, %p71
      %p73 = scmp.ne.s32.totalorder %s65, %s67
      %p74 = scmp.eq.s32.totalorder %s20, 6
      %p75 = por %p73, %p74
      %p76 = scmp.ne.s32.totalorder %s67, %s68
      %p77 = scmp.eq.s32.totalorder %s20, 0
      %p78 = por %p76, %p77
      %p79 = scmp.ne.s32.totalorder %s67, %s68
      %p80 = scmp.eq.s32.totalorder %s21, 6
      %p81 = por %p79, %p80
      %p83 = scmp.ne.s32.totalorder %s68, %s82
      %p84 = scmp.eq.s32.totalorder %s21, 0
      %p85 = por %p83, %p84
      %s86 = ssub.s32 %s15, %s22
      %p87 = scmp.eq.s32.totalorder %s86, 0
      %s89 = sadd.s32 %s88, 1
      %s90 = scalar_select %p87, %s88, %s89
      %p93 = pneg %p87
      %p94 = scmp.eq.s32.totalorder %s15, 6
      %p95 = por %p93, %p94
      %p96 = scmp.ne.s32.totalorder %s88, %s91
      %p97 = scmp.eq.s32.totalorder %s15, 0
      %p98 = por %p96, %p97
      %p99 = scmp.ne.s32.totalorder %s88, %s91
      %p100 = scmp.eq.s32.totalorder %s20, 6
      %p101 = por %p99, %p100
      %p102 = scmp.ne.s32.totalorder %s91, %s92
      %p103 = scmp.eq.s32.totalorder %s20, 0
      %p104 = por %p102, %p103
      %p105 = scmp.ne.s32.totalorder %s91, %s92
      %p106 = scmp.eq.s32.totalorder %s21, 6
      %p107 = por %p105, %p106
      %p109 = scmp.ne.s32.totalorder %s92, %s108
      %p110 = scmp.eq.s32.totalorder %s21, 0
      %p111 = por %p109, %p110
      %s112 = ssub.s32 %s15, %s22
      %p113 = scmp.eq.s32.totalorder %s112, 0
      %s115 = sadd.s32 %s114, 1
      %s116 = scalar_select %p113, %s114, %s115
      %p119 = pneg %p113
      %p120 = scmp.eq.s32.totalorder %s15, 6
      %p121 = por %p119, %p120
      %p122 = scmp.ne.s32.totalorder %s114, %s117
      %p123 = scmp.eq.s32.totalorder %s15, 0
      %p124 = por %p122, %p123
      %p125 = scmp.ne.s32.totalorder %s114, %s117
      %p126 = scmp.eq.s32.totalorder %s20, 6
      %p127 = por %p125, %p126
      %p128 = scmp.ne.s32.totalorder %s117, %s118
      %p129 = scmp.eq.s32.totalorder %s20, 0
      %p130 = por %p128, %p129
      %p131 = scmp.ne.s32.totalorder %s117, %s118
      %p132 = scmp.eq.s32.totalorder %s21, 6
      %p133 = por %p131, %p132
      %p135 = scmp.ne.s32.totalorder %s118, %s134
      %p136 = scmp.eq.s32.totalorder %s21, 0
      %p137 = por %p135, %p136
      %s139 = sadd.s32 %s138, 1
      %p142 = scmp.eq.s32.totalorder %s15, 6
      %p143 = scmp.ne.s32.totalorder %s138, %s140
      %p144 = scmp.eq.s32.totalorder %s15, 0
      %p145 = por %p143, %p144
      %p146 = scmp.ne.s32.totalorder %s138, %s140
      %p147 = scmp.eq.s32.totalorder %s20, 6
      %p148 = por %p146, %p147
      %p149 = scmp.ne.s32.totalorder %s140, %s141
      %p150 = scmp.eq.s32.totalorder %s20, 0
      %p151 = por %p149, %p150
      %p152 = scmp.ne.s32.totalorder %s140, %s141
      %p153 = scmp.eq.s32.totalorder %s21, 6
      %p154 = por %p152, %p153
      %p156 = scmp.ne.s32.totalorder %s141, %s155
      %p157 = scmp.eq.s32.totalorder %s21, 0
      %p158 = por %p156, %p157
      %s160 = sadd.s32 %s159, 1
      %p163 = scmp.eq.s32.totalorder %s15, 6
      %p164 = scmp.ne.s32.totalorder %s159, %s161
      %p165 = scmp.eq.s32.totalorder %s15, 0
      %p166 = por %p164, %p165
      %p167 = scmp.ne.s32.totalorder %s159, %s161
      %p168 = scmp.eq.s32.totalorder %s20, 6
      %p169 = por %p167, %p168
      %p170 = scmp.ne.s32.totalorder %s161, %s162
      %p171 = scmp.eq.s32.totalorder %s20, 0
      %p172 = por %p170, %p171
      %p173 = scmp.ne.s32.totalorder %s161, %s162
      %p174 = scmp.eq.s32.totalorder %s21, 6
      %p175 = por %p173, %p174
      %p177 = scmp.ne.s32.totalorder %s162, %s176
      %p178 = scmp.eq.s32.totalorder %s21, 0
      %p179 = por %p177, %p178
      %s181 = sadd.s32 %s180, 1
      %p184 = scmp.eq.s32.totalorder %s15, 6
      %p185 = scmp.ne.s32.totalorder %s180, %s182
      %p186 = scmp.eq.s32.totalorder %s15, 0
      %p187 = por %p185, %p186
      %p188 = scmp.ne.s32.totalorder %s180, %s182
      %p189 = scmp.eq.s32.totalorder %s20, 6
      %p190 = por %p188, %p189
      %p191 = scmp.ne.s32.totalorder %s182, %s183
      %p192 = scmp.eq.s32.totalorder %s20, 0
      %p193 = por %p191, %p192
      %p194 = scmp.ne.s32.totalorder %s182, %s183
      %p195 = scmp.eq.s32.totalorder %s21, 6
      %p196 = por %p194, %p195
      %p198 = scmp.ne.s32.totalorder %s183, %s197
      %p199 = scmp.eq.s32.totalorder %s21, 0
      %p200 = por %p198, %p199
      %p201 = scmp.le.s32.totalorder 1, %s15
      %p202 = scmp.lt.s32.totalorder %s15, 8
      %p203 = pnand %p201, %p202
      %p204 = pneg %p203
      // Predicated region
      $region9: #{backward_model_forward.1} parent=5 // pred_check
        _
      $region10: #{backward_model_forward.1} parent=5 // pred_check_branch
        %206 = sbr.rel (%p203) target = $region12
      $region11: #{backward_model_forward.1} parent=5 // pred_region
        %s207 = ssub.s32 %s15, 1
        // Predicated region
        $region13: #{backward_model_forward.1} parent=11 // pred_check
          %p208 = pneg %p36
        $region14: #{backward_model_forward.1} parent=11 // pred_check_branch
          %210 = sbr.rel (%p208) target = $region16
        $region15: #{backward_model_forward.1} parent=11 // pred_region
          _
        $region16: #{backward_model_forward.1} parent=11 // pred_fallthru
          _
        // Predicated region
        $region17: #{backward_model_forward.1} parent=11 // pred_check
          %p211 = pneg %p57
        $region18: #{backward_model_forward.1} parent=11 // pred_check_branch
          %213 = sbr.rel (%p211) target = $region20
        $region19: #{backward_model_forward.1} parent=11 // pred_region
          %s215 = ssub.s32 256, 256
          %216 = vsyncadd [#allocation4], %s215
          %s218 = sshll.u32 [#allocation3], 4
          %s219 = int_to_ptr.vmem [resolvable:$true] %s218
          %221 = dma.hbm_to_vmem [thread:$0]  %s1, 256, %s219, [#allocation4]
        $region20: #{backward_model_forward.1} parent=11 // pred_fallthru
          _
        // Predicated region
        $region21: #{backward_model_forward.1} parent=11 // pred_check
          %p222 = pneg %p78
        $region22: #{backward_model_forward.1} parent=11 // pred_check_branch
          %224 = sbr.rel (%p222) target = $region24
        $region23: #{backward_model_forward.1} parent=11 // pred_region
          %s226 = ssub.s32 64, 64
          %227 = vsyncadd [#allocation6], %s226
          %s229 = sshll.u32 [#allocation5], 4
          %s230 = int_to_ptr.vmem [resolvable:$true] %s229
          %232 = dma.hbm_to_vmem [thread:$0]  %s2, 64, %s230, [#allocation6]
        $region24: #{backward_model_forward.1} parent=11 // pred_fallthru
          _
        // Predicated region
        $region25: #{backward_model_forward.1} parent=11 // pred_check
          %p233 = pneg %p151
        $region26: #{backward_model_forward.1} parent=11 // pred_check_branch
          %235 = sbr.rel (%p233) target = $region28
        $region27: #{backward_model_forward.1} parent=11 // pred_region
          _
        $region28: #{backward_model_forward.1} parent=11 // pred_fallthru
          _
        // Predicated region
        $region29: #{backward_model_forward.1} parent=11 // pred_check
          %p236 = pneg %p172
        $region30: #{backward_model_forward.1} parent=11 // pred_check_branch
          %238 = sbr.rel (%p236) target = $region32
        $region31: #{backward_model_forward.1} parent=11 // pred_region
          %s240 = ssub.s32 16, 16
          %241 = vsyncadd [#allocation6], %s240
          %s243 = sshll.u32 [#allocation9], 4
          %s244 = int_to_ptr.vmem [resolvable:$true] %s243
          %246 = dma.hbm_to_vmem [thread:$0]  %s6, 16, %s244, [#allocation6]
        $region32: #{backward_model_forward.1} parent=11 // pred_fallthru
          _
      $region12: #{backward_model_forward.1} parent=5 // pred_fallthru
        _
      %p247 = scmp.lt.s32.totalorder %s15, 7
      // Predicated region
      $region33: #{backward_model_forward.1} parent=5 // pred_check
        %p248 = pneg %p247
      $region34: #{backward_model_forward.1} parent=5 // pred_check_branch
        %250 = sbr.rel (%p248) target = $region36
      $region35: #{backward_model_forward.1} parent=5 // pred_region
        // Predicated region
        $region37: #{backward_model_forward.1} parent=35 // pred_check
          %p251 = pneg %p98
        $region38: #{backward_model_forward.1} parent=35 // pred_check_branch
          %253 = sbr.rel (%p251) target = $region40
        $region39: #{backward_model_forward.1} parent=35 // pred_region
          %s254 = sand.u32 %s15, 1
          %s255 = scalar_lea.sflag [#allocation4], %s254
          %s256 = sand.u32 %s88, 1
          %s257 = smul.addr %s256, 1024
          %s258 = scalar_lea.vmem [#allocation7], %s257
          %s260 = ssub.s32 16384, 16384
          %261 = vsyncadd %s255, %s260
          %s262 = smul.addr %s15, 256
          %s263 = smul.addr %s262, 64
          %s264 = scalar_lea.hbm %s3, %s263
          %s265 = sshll.u32 %s258, 4
          %s266 = int_to_ptr.vmem [resolvable:$true] %s265
          %271 = dma.hbm_to_vmem [thread:$0]  %s264, 16384, %s266, %s255, 256, 256, 16
        $region40: #{backward_model_forward.1} parent=35 // pred_fallthru
          _
        // Predicated region
        $region41: #{backward_model_forward.1} parent=35 // pred_check
          %p272 = pneg %p124
        $region42: #{backward_model_forward.1} parent=35 // pred_check_branch
          %274 = sbr.rel (%p272) target = $region44
        $region43: #{backward_model_forward.1} parent=35 // pred_region
          %s275 = sand.u32 %s15, 1
          %s276 = scalar_lea.sflag [#allocation4], %s275
          %s277 = sand.u32 %s114, 1
          %s278 = smul.addr %s277, 4
          %s279 = scalar_lea.vmem [#allocation8], %s278
          %s281 = ssub.s32 64, 64
          %282 = vsyncadd %s276, %s281
          %s283 = smul.addr %s15, 4
          %s284 = smul.addr %s283, 16
          %s285 = scalar_lea.hbm %s4, %s284
          %s287 = sshll.u32 %s279, 4
          %s288 = int_to_ptr.vmem [resolvable:$true] %s287
          %290 = dma.hbm_to_vmem [thread:$0]  %s285, 64, %s288, %s276
        $region44: #{backward_model_forward.1} parent=35 // pred_fallthru
          _
      $region36: #{backward_model_forward.1} parent=5 // pred_fallthru
        _
      %p291 = scmp.le.s32.totalorder 1, %s15
      %p292 = scmp.lt.s32.totalorder %s15, 8
      %p293 = pnand %p291, %p292
      %p294 = pneg %p293
      // Predicated region
      $region45: #{backward_model_forward.1} parent=5 // pred_check
        _
      $region46: #{backward_model_forward.1} parent=5 // pred_check_branch
        %296 = sbr.rel (%p293) target = $region48
      $region47: #{backward_model_forward.1} parent=5 // pred_region
        %s297 = ssub.s32 %s15, 1
        // Predicated region
        $region49: #{backward_model_forward.1} parent=47 // pred_check
          %p298 = pneg %p57
        $region50: #{backward_model_forward.1} parent=47 // pred_check_branch
          %300 = sbr.rel (%p298) target = $region52
        $region51: #{backward_model_forward.1} parent=47 // pred_region
          %301 = dma.done [#allocation4], 256
        $region52: #{backward_model_forward.1} parent=47 // pred_fallthru
          _
        // Predicated region
        $region53: #{backward_model_forward.1} parent=47 // pred_check
          %p302 = pneg %p78
        $region54: #{backward_model_forward.1} parent=47 // pred_check_branch
          %304 = sbr.rel (%p302) target = $region56
        $region55: #{backward_model_forward.1} parent=47 // pred_region
          %305 = dma.done [#allocation6], 64
        $region56: #{backward_model_forward.1} parent=47 // pred_fallthru
          _
        %s306 = sand.u32 %s20, 1
        %s307 = scalar_lea.sflag [#allocation4], %s306
        %s308 = sand.u32 %s91, 1
        %s309 = smul.addr %s308, 1024
        %s310 = scalar_lea.vmem [#allocation7], %s309
        // Predicated region
        $region57: #{backward_model_forward.1} parent=47 // pred_check
          %p311 = pneg %p104
        $region58: #{backward_model_forward.1} parent=47 // pred_check_branch
          %313 = sbr.rel (%p311) target = $region60
        $region59: #{backward_model_forward.1} parent=47 // pred_region
          %314 = dma.done %s307, 16384
        $region60: #{backward_model_forward.1} parent=47 // pred_fallthru
          _
        %s315 = sand.u32 %s20, 1
        %s316 = scalar_lea.sflag [#allocation4], %s315
        %s317 = sand.u32 %s117, 1
        %s318 = smul.addr %s317, 4
        %s319 = scalar_lea.vmem [#allocation8], %s318
        // Predicated region
        $region61: #{backward_model_forward.1} parent=47 // pred_check
          %p320 = pneg %p130
        $region62: #{backward_model_forward.1} parent=47 // pred_check_branch
          %322 = sbr.rel (%p320) target = $region64
        $region63: #{backward_model_forward.1} parent=47 // pred_region
          %323 = dma.done %s316, 64
        $region64: #{backward_model_forward.1} parent=47 // pred_fallthru
          _
        // Predicated region
        $region65: #{backward_model_forward.1} parent=47 // pred_check
          %p324 = pneg %p172
        $region66: #{backward_model_forward.1} parent=47 // pred_check_branch
          %326 = sbr.rel (%p324) target = $region68
        $region67: #{backward_model_forward.1} parent=47 // pred_region
          %327 = dma.done [#allocation6], 16
        $region68: #{backward_model_forward.1} parent=47 // pred_fallthru
          _
        %p328 = pneg %p36
        %p329 = pneg %p33
        %p330 = pneg %p57
        %p331 = pneg %p54
        %p332 = pneg %p78
        %p333 = pneg %p75
        %s334 = sand.u32 %s20, 1
        %s335 = scalar_lea.sflag [#allocation4], %s334
        %s336 = sand.u32 %s91, 1
        %s337 = smul.addr %s336, 1024
        %s338 = scalar_lea.vmem [#allocation7], %s337
        %p339 = pneg %p104
        %p340 = pneg %p101
        %s341 = sand.u32 %s20, 1
        %s342 = scalar_lea.sflag [#allocation4], %s341
        %s343 = sand.u32 %s117, 1
        %s344 = smul.addr %s343, 4
        %s345 = scalar_lea.vmem [#allocation8], %s344
        %p346 = pneg %p130
        %p347 = pneg %p127
        %p348 = pneg %p151
        %p349 = pneg %p148
        %p350 = pneg %p172
        %p351 = pneg %p169
        %p352 = pneg %p193
        %p353 = pneg %p190
        %p355 = scmp.eq.s32.totalorder %s20, 0
        // Predicated region
        $region69: #{backward_model_forward.1} parent=47 // pred_check
          %p356 = pneg %p355
        $region70: #{backward_model_forward.1} parent=47 // pred_check_branch
          %358 = sbr.rel (%p356) target = $region72
        $region71: #{backward_model_forward.1} parent=47 // pred_region
          %v359 = vld [vmem:[%s0] sm:$0xf]
          %v360 = vld [vmem:[#allocation3] sm:$0xff]
          %v361 = vld [vmem:[#allocation3 + $0x8] sm:$0xff]
          %v362 = vld [vmem:[#allocation5] sm:$0xf]
          %v364 = vlaneseq
          %v365 = vshrl.u32 %v364, 7
          %v366 = vsub.s32 0, %v365
          %v367 = vrot.slane %v362, %v366
          %v368 = vlaneseq
          %v369 = vshrl.u32 %v368, 7
          %v370 = vsub.s32 1, %v369
          %v371 = vrot.slane %v362, %v370
          %v372 = vlaneseq
          %v373 = vshrl.u32 %v372, 7
          %v374 = vsub.s32 2, %v373
          %v375 = vrot.slane %v362, %v374
          %v376 = vlaneseq
          %v377 = vshrl.u32 %v376, 7
          %v378 = vsub.s32 3, %v377
          %v379 = vrot.slane %v362, %v378
          %v386 = vunpack.c.l.b16 %v360
          %v387 = vunpack.c.h.b16 %v360
          %v388 = vunpack.c.l.b16 %v361
          %v389 = vunpack.c.h.b16 %v361
          %v390 = vpack.c.b16 %v386, %v386
          %v391 = vpack.c.b16 %v387, %v387
          %v392 = vpack.c.b16 %v388, %v388
          %v393 = vpack.c.b16 %v389, %v389
          %vm394 = vcmask 64512
          %v396 = vsel %vm394, %v359, 0
          %vm398 = vcmask 1043456
          %v400 = vsel %vm398, %v390, 0
          %v403 = vsel %vm398, %v391, 0
          %v406 = vsel %vm398, %v392, 0
          %v409 = vsel %vm398, %v393, 0
          %411 = vmatprep.subr.bf16.mxu0 %v403
          %412 = vmatpush1.bf16.msra.mxu0 %v400
          %413 = vmatprep.subr.bf16.mxu0 0
          %414 = vmatpush1.bf16.msra.mxu0 0
          %415 = vmatprep.subr.bf16.mxu0 0
          %416 = vmatpush1.bf16.msra.mxu0 0
          %417 = vmatprep.subr.bf16.mxu0 0
          %418 = vmatpush1.bf16.msra.mxu0 0
          %419 = vmatprep.subr.bf16.mxu0 0
          %420 = vmatpush1.bf16.msra.mxu0 0
          %421 = vmatprep.subr.bf16.mxu0 0
          %422 = vmatpush1.bf16.msra.mxu0 0
          %423 = vmatprep.subr.bf16.mxu0 0
          %424 = vmatpush1.bf16.msra.mxu0 0
          %425 = vmatprep.subr.bf16.mxu0 0
          %426 = vmatpush1.bf16.msra.mxu0 0
          %427 = vmatprep.subr.bf16.mxu0 0
          %428 = vmatpush1.bf16.msra.mxu0 0
          %429 = vmatprep.subr.bf16.mxu0 0
          %430 = vmatpush1.bf16.msra.mxu0 0
          %431 = vmatprep.subr.bf16.mxu0 0
          %432 = vmatpush1.bf16.msra.mxu0 0
          %433 = vmatprep.subr.bf16.mxu0 0
          %434 = vmatpush1.bf16.msra.mxu0 0
          %435 = vmatprep.subr.bf16.mxu0 0
          %436 = vmatpush1.bf16.msra.mxu0 0
          %437 = vmatprep.subr.bf16.mxu0 0
          %438 = vmatpush1.bf16.msra.mxu0 0
          %439 = vmatprep.subr.bf16.mxu0 0
          %440 = vmatpush1.bf16.msra.mxu0 0
          %441 = vmatprep.subr.bf16.mxu0 0
          %442 = vmatpush1.bf16.msra.mxu0 0
          %443 = vmatprep.mubr.bf16.mxu0 0
          %444 = vmatmul.mubr.bf16.gmra.mrb[0].mxu0 %v396
          %v445 = vpop.f32.mrb[0].mxu0
          %v446 = vadd.f32 %v367, %v445
          %v447 = vpop.f32.mrb[0].mxu0
          %v448 = vadd.f32 %v371, %v447
          %v449 = vpop.f32.mrb[0].mxu0
          %v450 = vpop.f32.mrb[0].mxu0
          %451 = vdwg.mxu0
          %452 = vmatprep.subr.bf16.mxu0 %v409
          %453 = vmatpush1.bf16.msra.mxu0 %v406
          %454 = vmatprep.subr.bf16.mxu0 0
          %455 = vmatpush1.bf16.msra.mxu0 0
          %456 = vmatprep.subr.bf16.mxu0 0
          %457 = vmatpush1.bf16.msra.mxu0 0
          %458 = vmatprep.subr.bf16.mxu0 0
          %459 = vmatpush1.bf16.msra.mxu0 0
          %460 = vmatprep.subr.bf16.mxu0 0
          %461 = vmatpush1.bf16.msra.mxu0 0
          %462 = vmatprep.subr.bf16.mxu0 0
          %463 = vmatpush1.bf16.msra.mxu0 0
          %464 = vmatprep.subr.bf16.mxu0 0
          %465 = vmatpush1.bf16.msra.mxu0 0
          %466 = vmatprep.subr.bf16.mxu0 0
          %467 = vmatpush1.bf16.msra.mxu0 0
          %468 = vmatprep.subr.bf16.mxu0 0
          %469 = vmatpush1.bf16.msra.mxu0 0
          %470 = vmatprep.subr.bf16.mxu0 0
          %471 = vmatpush1.bf16.msra.mxu0 0
          %472 = vmatprep.subr.bf16.mxu0 0
          %473 = vmatpush1.bf16.msra.mxu0 0
          %474 = vmatprep.subr.bf16.mxu0 0
          %475 = vmatpush1.bf16.msra.mxu0 0
          %476 = vmatprep.subr.bf16.mxu0 0
          %477 = vmatpush1.bf16.msra.mxu0 0
          %478 = vmatprep.subr.bf16.mxu0 0
          %479 = vmatpush1.bf16.msra.mxu0 0
          %480 = vmatprep.subr.bf16.mxu0 0
          %481 = vmatpush1.bf16.msra.mxu0 0
          %482 = vmatprep.subr.bf16.mxu0 0
          %483 = vmatpush1.bf16.msra.mxu0 0
          %484 = vmatprep.mubr.bf16.mxu0 0
          %485 = vmatmul.mubr.bf16.gmra.mrb[0].mxu0 %v396
          %v486 = vpop.f32.mrb[0].mxu0
          %v487 = vadd.f32 %v375, %v486
          %v488 = vpop.f32.mrb[0].mxu0
          %v489 = vadd.f32 %v379, %v488
          %v490 = vpop.f32.mrb[0].mxu0
          %v491 = vpop.f32.mrb[0].mxu0
          %492 = vdwg.mxu0
          %v493 = vmax.f32 %v446, 0.0
          %v494 = vmax.f32 %v448, 0.0
          %v495 = vmax.f32 %v487, 0.0
          %v496 = vmax.f32 %v489, 0.0
          %v497 = vpack.c.bf16 %v493, %v493
          %v498 = vpack.c.bf16 %v494, %v494
          %v499 = vpack.c.bf16 %v495, %v495
          %v500 = vpack.c.bf16 %v496, %v496
          %v505 = vunpack.c.l.b16 %v497
          %v506 = vunpack.c.l.b16 %v498
          %v507 = vunpack.c.l.b16 %v499
          %v508 = vunpack.c.l.b16 %v500
          %v509 = vpack.c.b16 %v506, %v505
          %v510 = vpack.c.b16 %v508, %v507
          %513 = vst [vmem:[#allocation2] sm:$0xff] %v509
          %514 = vst [vmem:[#allocation2 + $0x8] sm:$0xff] %v510
        $region72: #{backward_model_forward.1} parent=47 // pred_fallthru
          _
        %v515 = vld [vmem:[#allocation2] sm:$0xff]
        %v516 = vld [vmem:[#allocation2 + $0x8] sm:$0xff]
        %v517 = vld [vmem:[%s310] sm:$0xff]
        %v518 = vld [vmem:[%s310 + $0x8] sm:$0xff]
        %v519 = vld [vmem:[%s310 + $0x10] sm:$0xff]
        %v520 = vld [vmem:[%s310 + $0x18] sm:$0xff]
        %v521 = vld [vmem:[%s310 + $0x20] sm:$0xff]
        %v522 = vld [vmem:[%s310 + $0x28] sm:$0xff]
        %v523 = vld [vmem:[%s310 + $0x30] sm:$0xff]
        %v524 = vld [vmem:[%s310 + $0x38] sm:$0xff]
        %v525 = vld [vmem:[%s310 + $0x40] sm:$0xff]
        %v526 = vld [vmem:[%s310 + $0x48] sm:$0xff]
        %v527 = vld [vmem:[%s310 + $0x50] sm:$0xff]
        %v528 = vld [vmem:[%s310 + $0x58] sm:$0xff]
        %v529 = vld [vmem:[%s310 + $0x60] sm:$0xff]
        %v530 = vld [vmem:[%s310 + $0x68] sm:$0xff]
        %v531 = vld [vmem:[%s310 + $0x70] sm:$0xff]
        %v532 = vld [vmem:[%s310 + $0x78] sm:$0xff]
        %v533 = vld [vmem:[%s310 + $0x80] sm:$0xff]
        %v534 = vld [vmem:[%s310 + $0x88] sm:$0xff]
        %v535 = vld [vmem:[%s310 + $0x90] sm:$0xff]
        %v536 = vld [vmem:[%s310 + $0x98] sm:$0xff]
        %v537 = vld [vmem:[%s310 + $0xa0] sm:$0xff]
        %v538 = vld [vmem:[%s310 + $0xa8] sm:$0xff]
        %v539 = vld [vmem:[%s310 + $0xb0] sm:$0xff]
        %v540 = vld [vmem:[%s310 + $0xb8] sm:$0xff]
        %v541 = vld [vmem:[%s310 + $0xc0] sm:$0xff]
        %v542 = vld [vmem:[%s310 + $0xc8] sm:$0xff]
        %v543 = vld [vmem:[%s310 + $0xd0] sm:$0xff]
        %v544 = vld [vmem:[%s310 + $0xd8] sm:$0xff]
        %v545 = vld [vmem:[%s310 + $0xe0] sm:$0xff]
        %v546 = vld [vmem:[%s310 + $0xe8] sm:$0xff]
        %v547 = vld [vmem:[%s310 + $0xf0] sm:$0xff]
        %v548 = vld [vmem:[%s310 + $0xf8] sm:$0xff]
        %v549 = vld [vmem:[%s310 + $0x100] sm:$0xff]
        %v550 = vld [vmem:[%s310 + $0x108] sm:$0xff]
        %v551 = vld [vmem:[%s310 + $0x110] sm:$0xff]
        %v552 = vld [vmem:[%s310 + $0x118] sm:$0xff]
        %v553 = vld [vmem:[%s310 + $0x120] sm:$0xff]
        %v554 = vld [vmem:[%s310 + $0x128] sm:$0xff]
        %v555 = vld [vmem:[%s310 + $0x130] sm:$0xff]
        %v556 = vld [vmem:[%s310 + $0x138] sm:$0xff]
        %v557 = vld [vmem:[%s310 + $0x140] sm:$0xff]
        %v558 = vld [vmem:[%s310 + $0x148] sm:$0xff]
        %v559 = vld [vmem:[%s310 + $0x150] sm:$0xff]
        %v560 = vld [vmem:[%s310 + $0x158] sm:$0xff]
        %v561 = vld [vmem:[%s310 + $0x160] sm:$0xff]
        %v562 = vld [vmem:[%s310 + $0x168] sm:$0xff]
        %v563 = vld [vmem:[%s310 + $0x170] sm:$0xff]
        %v564 = vld [vmem:[%s310 + $0x178] sm:$0xff]
        %v565 = vld [vmem:[%s310 + $0x180] sm:$0xff]
        %v566 = vld [vmem:[%s310 + $0x188] sm:$0xff]
        %v567 = vld [vmem:[%s310 + $0x190] sm:$0xff]
        %v568 = vld [vmem:[%s310 + $0x198] sm:$0xff]
        %v569 = vld [vmem:[%s310 + $0x1a0] sm:$0xff]
        %v570 = vld [vmem:[%s310 + $0x1a8] sm:$0xff]
        %v571 = vld [vmem:[%s310 + $0x1b0] sm:$0xff]
        %v572 = vld [vmem:[%s310 + $0x1b8] sm:$0xff]
        %v573 = vld [vmem:[%s310 + $0x1c0] sm:$0xff]
        %v574 = vld [vmem:[%s310 + $0x1c8] sm:$0xff]
        %v575 = vld [vmem:[%s310 + $0x1d0] sm:$0xff]
        %v576 = vld [vmem:[%s310 + $0x1d8] sm:$0xff]
        %v577 = vld [vmem:[%s310 + $0x1e0] sm:$0xff]
        %v578 = vld [vmem:[%s310 + $0x1e8] sm:$0xff]
        %v579 = vld [vmem:[%s310 + $0x1f0] sm:$0xff]
        %v580 = vld [vmem:[%s310 + $0x1f8] sm:$0xff]
        %v581 = vld [vmem:[%s310 + $0x200] sm:$0xff]
        %v582 = vld [vmem:[%s310 + $0x208] sm:$0xff]
        %v583 = vld [vmem:[%s310 + $0x210] sm:$0xff]
        %v584 = vld [vmem:[%s310 + $0x218] sm:$0xff]
        %v585 = vld [vmem:[%s310 + $0x220] sm:$0xff]
        %v586 = vld [vmem:[%s310 + $0x228] sm:$0xff]
        %v587 = vld [vmem:[%s310 + $0x230] sm:$0xff]
        %v588 = vld [vmem:[%s310 + $0x238] sm:$0xff]
        %v589 = vld [vmem:[%s310 + $0x240] sm:$0xff]
        %v590 = vld [vmem:[%s310 + $0x248] sm:$0xff]
        %v591 = vld [vmem:[%s310 + $0x250] sm:$0xff]
        %v592 = vld [vmem:[%s310 + $0x258] sm:$0xff]
        %v593 = vld [vmem:[%s310 + $0x260] sm:$0xff]
        %v594 = vld [vmem:[%s310 + $0x268] sm:$0xff]
        %v595 = vld [vmem:[%s310 + $0x270] sm:$0xff]
        %v596 = vld [vmem:[%s310 + $0x278] sm:$0xff]
        %v597 = vld [vmem:[%s310 + $0x280] sm:$0xff]
        %v598 = vld [vmem:[%s310 + $0x288] sm:$0xff]
        %v599 = vld [vmem:[%s310 + $0x290] sm:$0xff]
        %v600 = vld [vmem:[%s310 + $0x298] sm:$0xff]
        %v601 = vld [vmem:[%s310 + $0x2a0] sm:$0xff]
        %v602 = vld [vmem:[%s310 + $0x2a8] sm:$0xff]
        %v603 = vld [vmem:[%s310 + $0x2b0] sm:$0xff]
        %v604 = vld [vmem:[%s310 + $0x2b8] sm:$0xff]
        %v605 = vld [vmem:[%s310 + $0x2c0] sm:$0xff]
        %v606 = vld [vmem:[%s310 + $0x2c8] sm:$0xff]
        %v607 = vld [vmem:[%s310 + $0x2d0] sm:$0xff]
        %v608 = vld [vmem:[%s310 + $0x2d8] sm:$0xff]
        %v609 = vld [vmem:[%s310 + $0x2e0] sm:$0xff]
        %v610 = vld [vmem:[%s310 + $0x2e8] sm:$0xff]
        %v611 = vld [vmem:[%s310 + $0x2f0] sm:$0xff]
        %v612 = vld [vmem:[%s310 + $0x2f8] sm:$0xff]
        %v613 = vld [vmem:[%s310 + $0x300] sm:$0xff]
        %v614 = vld [vmem:[%s310 + $0x308] sm:$0xff]
        %v615 = vld [vmem:[%s310 + $0x310] sm:$0xff]
        %v616 = vld [vmem:[%s310 + $0x318] sm:$0xff]
        %v617 = vld [vmem:[%s310 + $0x320] sm:$0xff]
        %v618 = vld [vmem:[%s310 + $0x328] sm:$0xff]
        %v619 = vld [vmem:[%s310 + $0x330] sm:$0xff]
        %v620 = vld [vmem:[%s310 + $0x338] sm:$0xff]
        %v621 = vld [vmem:[%s310 + $0x340] sm:$0xff]
        %v622 = vld [vmem:[%s310 + $0x348] sm:$0xff]
        %v623 = vld [vmem:[%s310 + $0x350] sm:$0xff]
        %v624 = vld [vmem:[%s310 + $0x358] sm:$0xff]
        %v625 = vld [vmem:[%s310 + $0x360] sm:$0xff]
        %v626 = vld [vmem:[%s310 + $0x368] sm:$0xff]
        %v627 = vld [vmem:[%s310 + $0x370] sm:$0xff]
        %v628 = vld [vmem:[%s310 + $0x378] sm:$0xff]
        %v629 = vld [vmem:[%s310 + $0x380] sm:$0xff]
        %v630 = vld [vmem:[%s310 + $0x388] sm:$0xff]
        %v631 = vld [vmem:[%s310 + $0x390] sm:$0xff]
        %v632 = vld [vmem:[%s310 + $0x398] sm:$0xff]
        %v633 = vld [vmem:[%s310 + $0x3a0] sm:$0xff]
        %v634 = vld [vmem:[%s310 + $0x3a8] sm:$0xff]
        %v635 = vld [vmem:[%s310 + $0x3b0] sm:$0xff]
        %v636 = vld [vmem:[%s310 + $0x3b8] sm:$0xff]
        %v637 = vld [vmem:[%s310 + $0x3c0] sm:$0xff]
        %v638 = vld [vmem:[%s310 + $0x3c8] sm:$0xff]
        %v639 = vld [vmem:[%s310 + $0x3d0] sm:$0xff]
        %v640 = vld [vmem:[%s310 + $0x3d8] sm:$0xff]
        %v641 = vld [vmem:[%s310 + $0x3e0] sm:$0xff]
        %v642 = vld [vmem:[%s310 + $0x3e8] sm:$0xff]
        %v643 = vld [vmem:[%s310 + $0x3f0] sm:$0xff]
        %v644 = vld [vmem:[%s310 + $0x3f8] sm:$0xff]
        %v645 = vld [vmem:[%s319] sm:$0xf]
        %v647 = vlaneseq
        %v648 = vshrl.u32 %v647, 7
        %v649 = vsub.s32 0, %v648
        %v650 = vrot.slane %v645, %v649
        %v651 = vlaneseq
        %v652 = vshrl.u32 %v651, 7
        %v653 = vsub.s32 1, %v652
        %v654 = vrot.slane %v645, %v653
        %v655 = vlaneseq
        %v656 = vshrl.u32 %v655, 7
        %v657 = vsub.s32 2, %v656
        %v658 = vrot.slane %v645, %v657
        %v659 = vlaneseq
        %v660 = vshrl.u32 %v659, 7
        %v661 = vsub.s32 3, %v660
        %v662 = vrot.slane %v645, %v661
        %v669 = vunpack.c.l.b16 %v515
        %v670 = vunpack.c.h.b16 %v515
        %v671 = vunpack.c.l.b16 %v516
        %v672 = vunpack.c.h.b16 %v516
        %v673 = vpack.c.b16 %v669, %v669
        %v674 = vpack.c.b16 %v670, %v670
        %v675 = vpack.c.b16 %v671, %v671
        %v676 = vpack.c.b16 %v672, %v672
        %v809 = vunpack.c.l.b16 %v517
        %v810 = vunpack.c.h.b16 %v517
        %v811 = vunpack.c.l.b16 %v518
        %v812 = vunpack.c.h.b16 %v518
        %v813 = vunpack.c.l.b16 %v519
        %v814 = vunpack.c.h.b16 %v519
        %v815 = vunpack.c.l.b16 %v520
        %v816 = vunpack.c.h.b16 %v520
        %v817 = vunpack.c.l.b16 %v521
        %v818 = vunpack.c.h.b16 %v521
        %v819 = vunpack.c.l.b16 %v522
        %v820 = vunpack.c.h.b16 %v522
        %v821 = vunpack.c.l.b16 %v523
        %v822 = vunpack.c.h.b16 %v523
        %v823 = vunpack.c.l.b16 %v524
        %v824 = vunpack.c.h.b16 %v524
        %v825 = vunpack.c.l.b16 %v525
        %v826 = vunpack.c.h.b16 %v525
        %v827 = vunpack.c.l.b16 %v526
        %v828 = vunpack.c.h.b16 %v526
        %v829 = vunpack.c.l.b16 %v527
        %v830 = vunpack.c.h.b16 %v527
        %v831 = vunpack.c.l.b16 %v528
        %v832 = vunpack.c.h.b16 %v528
        %v833 = vunpack.c.l.b16 %v529
        %v834 = vunpack.c.h.b16 %v529
        %v835 = vunpack.c.l.b16 %v530
        %v836 = vunpack.c.h.b16 %v530
        %v837 = vunpack.c.l.b16 %v531
        %v838 = vunpack.c.h.b16 %v531
        %v839 = vunpack.c.l.b16 %v532
        %v840 = vunpack.c.h.b16 %v532
        %v841 = vunpack.c.l.b16 %v533
        %v842 = vunpack.c.h.b16 %v533
        %v843 = vunpack.c.l.b16 %v534
        %v844 = vunpack.c.h.b16 %v534
        %v845 = vunpack.c.l.b16 %v535
        %v846 = vunpack.c.h.b16 %v535
        %v847 = vunpack.c.l.b16 %v536
        %v848 = vunpack.c.h.b16 %v536
        %v849 = vunpack.c.l.b16 %v537
        %v850 = vunpack.c.h.b16 %v537
        %v851 = vunpack.c.l.b16 %v538
        %v852 = vunpack.c.h.b16 %v538
        %v853 = vunpack.c.l.b16 %v539
        %v854 = vunpack.c.h.b16 %v539
        %v855 = vunpack.c.l.b16 %v540
        %v856 = vunpack.c.h.b16 %v540
        %v857 = vunpack.c.l.b16 %v541
        %v858 = vunpack.c.h.b16 %v541
        %v859 = vunpack.c.l.b16 %v542
        %v860 = vunpack.c.h.b16 %v542
        %v861 = vunpack.c.l.b16 %v543
        %v862 = vunpack.c.h.b16 %v543
        %v863 = vunpack.c.l.b16 %v544
        %v864 = vunpack.c.h.b16 %v544
        %v865 = vunpack.c.l.b16 %v545
        %v866 = vunpack.c.h.b16 %v545
        %v867 = vunpack.c.l.b16 %v546
        %v868 = vunpack.c.h.b16 %v546
        %v869 = vunpack.c.l.b16 %v547
        %v870 = vunpack.c.h.b16 %v547
        %v871 = vunpack.c.l.b16 %v548
        %v872 = vunpack.c.h.b16 %v548
        %v873 = vunpack.c.l.b16 %v549
        %v874 = vunpack.c.h.b16 %v549
        %v875 = vunpack.c.l.b16 %v550
        %v876 = vunpack.c.h.b16 %v550
        %v877 = vunpack.c.l.b16 %v551
        %v878 = vunpack.c.h.b16 %v551
        %v879 = vunpack.c.l.b16 %v552
        %v880 = vunpack.c.h.b16 %v552
        %v881 = vunpack.c.l.b16 %v553
        %v882 = vunpack.c.h.b16 %v553
        %v883 = vunpack.c.l.b16 %v554
        %v884 = vunpack.c.h.b16 %v554
        %v885 = vunpack.c.l.b16 %v555
        %v886 = vunpack.c.h.b16 %v555
        %v887 = vunpack.c.l.b16 %v556
        %v888 = vunpack.c.h.b16 %v556
        %v889 = vunpack.c.l.b16 %v557
        %v890 = vunpack.c.h.b16 %v557
        %v891 = vunpack.c.l.b16 %v558
        %v892 = vunpack.c.h.b16 %v558
        %v893 = vunpack.c.l.b16 %v559
        %v894 = vunpack.c.h.b16 %v559
        %v895 = vunpack.c.l.b16 %v560
        %v896 = vunpack.c.h.b16 %v560
        %v897 = vunpack.c.l.b16 %v561
        %v898 = vunpack.c.h.b16 %v561
        %v899 = vunpack.c.l.b16 %v562
        %v900 = vunpack.c.h.b16 %v562
        %v901 = vunpack.c.l.b16 %v563
        %v902 = vunpack.c.h.b16 %v563
        %v903 = vunpack.c.l.b16 %v564
        %v904 = vunpack.c.h.b16 %v564
        %v905 = vunpack.c.l.b16 %v565
        %v906 = vunpack.c.h.b16 %v565
        %v907 = vunpack.c.l.b16 %v566
        %v908 = vunpack.c.h.b16 %v566
        %v909 = vunpack.c.l.b16 %v567
        %v910 = vunpack.c.h.b16 %v567
        %v911 = vunpack.c.l.b16 %v568
        %v912 = vunpack.c.h.b16 %v568
        %v913 = vunpack.c.l.b16 %v569
        %v914 = vunpack.c.h.b16 %v569
        %v915 = vunpack.c.l.b16 %v570
        %v916 = vunpack.c.h.b16 %v570
        %v917 = vunpack.c.l.b16 %v571
        %v918 = vunpack.c.h.b16 %v571
        %v919 = vunpack.c.l.b16 %v572
        %v920 = vunpack.c.h.b16 %v572
        %v921 = vunpack.c.l.b16 %v573
        %v922 = vunpack.c.h.b16 %v573
        %v923 = vunpack.c.l.b16 %v574
        %v924 = vunpack.c.h.b16 %v574
        %v925 = vunpack.c.l.b16 %v575
        %v926 = vunpack.c.h.b16 %v575
        %v927 = vunpack.c.l.b16 %v576
        %v928 = vunpack.c.h.b16 %v576
        %v929 = vunpack.c.l.b16 %v577
        %v930 = vunpack.c.h.b16 %v577
        %v931 = vunpack.c.l.b16 %v578
        %v932 = vunpack.c.h.b16 %v578
        %v933 = vunpack.c.l.b16 %v579
        %v934 = vunpack.c.h.b16 %v579
        %v935 = vunpack.c.l.b16 %v580
        %v936 = vunpack.c.h.b16 %v580
        %v937 = vunpack.c.l.b16 %v581
        %v938 = vunpack.c.h.b16 %v581
        %v939 = vunpack.c.l.b16 %v582
        %v940 = vunpack.c.h.b16 %v582
        %v941 = vunpack.c.l.b16 %v583
        %v942 = vunpack.c.h.b16 %v583
        %v943 = vunpack.c.l.b16 %v584
        %v944 = vunpack.c.h.b16 %v584
        %v945 = vunpack.c.l.b16 %v585
        %v946 = vunpack.c.h.b16 %v585
        %v947 = vunpack.c.l.b16 %v586
        %v948 = vunpack.c.h.b16 %v586
        %v949 = vunpack.c.l.b16 %v587
        %v950 = vunpack.c.h.b16 %v587
        %v951 = vunpack.c.l.b16 %v588
        %v952 = vunpack.c.h.b16 %v588
        %v953 = vunpack.c.l.b16 %v589
        %v954 = vunpack.c.h.b16 %v589
        %v955 = vunpack.c.l.b16 %v590
        %v956 = vunpack.c.h.b16 %v590
        %v957 = vunpack.c.l.b16 %v591
        %v958 = vunpack.c.h.b16 %v591
        %v959 = vunpack.c.l.b16 %v592
        %v960 = vunpack.c.h.b16 %v592
        %v961 = vunpack.c.l.b16 %v593
        %v962 = vunpack.c.h.b16 %v593
        %v963 = vunpack.c.l.b16 %v594
        %v964 = vunpack.c.h.b16 %v594
        %v965 = vunpack.c.l.b16 %v595
        %v966 = vunpack.c.h.b16 %v595
        %v967 = vunpack.c.l.b16 %v596
        %v968 = vunpack.c.h.b16 %v596
        %v969 = vunpack.c.l.b16 %v597
        %v970 = vunpack.c.h.b16 %v597
        %v971 = vunpack.c.l.b16 %v598
        %v972 = vunpack.c.h.b16 %v598
        %v973 = vunpack.c.l.b16 %v599
        %v974 = vunpack.c.h.b16 %v599
        %v975 = vunpack.c.l.b16 %v600
        %v976 = vunpack.c.h.b16 %v600
        %v977 = vunpack.c.l.b16 %v601
        %v978 = vunpack.c.h.b16 %v601
        %v979 = vunpack.c.l.b16 %v602
        %v980 = vunpack.c.h.b16 %v602
        %v981 = vunpack.c.l.b16 %v603
        %v982 = vunpack.c.h.b16 %v603
        %v983 = vunpack.c.l.b16 %v604
        %v984 = vunpack.c.h.b16 %v604
        %v985 = vunpack.c.l.b16 %v605
        %v986 = vunpack.c.h.b16 %v605
        %v987 = vunpack.c.l.b16 %v606
        %v988 = vunpack.c.h.b16 %v606
        %v989 = vunpack.c.l.b16 %v607
        %v990 = vunpack.c.h.b16 %v607
        %v991 = vunpack.c.l.b16 %v608
        %v992 = vunpack.c.h.b16 %v608
        %v993 = vunpack.c.l.b16 %v609
        %v994 = vunpack.c.h.b16 %v609
        %v995 = vunpack.c.l.b16 %v610
        %v996 = vunpack.c.h.b16 %v610
        %v997 = vunpack.c.l.b16 %v611
        %v998 = vunpack.c.h.b16 %v611
        %v999 = vunpack.c.l.b16 %v612
        %v1000 = vunpack.c.h.b16 %v612
        %v1001 = vunpack.c.l.b16 %v613
        %v1002 = vunpack.c.h.b16 %v613
        %v1003 = vunpack.c.l.b16 %v614
        %v1004 = vunpack.c.h.b16 %v614
        %v1005 = vunpack.c.l.b16 %v615
        %v1006 = vunpack.c.h.b16 %v615
        %v1007 = vunpack.c.l.b16 %v616
        %v1008 = vunpack.c.h.b16 %v616
        %v1009 = vunpack.c.l.b16 %v617
        %v1010 = vunpack.c.h.b16 %v617
        %v1011 = vunpack.c.l.b16 %v618
        %v1012 = vunpack.c.h.b16 %v618
        %v1013 = vunpack.c.l.b16 %v619
        %v1014 = vunpack.c.h.b16 %v619
        %v1015 = vunpack.c.l.b16 %v620
        %v1016 = vunpack.c.h.b16 %v620
        %v1017 = vunpack.c.l.b16 %v621
        %v1018 = vunpack.c.h.b16 %v621
        %v1019 = vunpack.c.l.b16 %v622
        %v1020 = vunpack.c.h.b16 %v622
        %v1021 = vunpack.c.l.b16 %v623
        %v1022 = vunpack.c.h.b16 %v623
        %v1023 = vunpack.c.l.b16 %v624
        %v1024 = vunpack.c.h.b16 %v624
        %v1025 = vunpack.c.l.b16 %v625
        %v1026 = vunpack.c.h.b16 %v625
        %v1027 = vunpack.c.l.b16 %v626
        %v1028 = vunpack.c.h.b16 %v626
        %v1029 = vunpack.c.l.b16 %v627
        %v1030 = vunpack.c.h.b16 %v627
        %v1031 = vunpack.c.l.b16 %v628
        %v1032 = vunpack.c.h.b16 %v628
        %v1033 = vunpack.c.l.b16 %v629
        %v1034 = vunpack.c.h.b16 %v629
        %v1035 = vunpack.c.l.b16 %v630
        %v1036 = vunpack.c.h.b16 %v630
        %v1037 = vunpack.c.l.b16 %v631
        %v1038 = vunpack.c.h.b16 %v631
        %v1039 = vunpack.c.l.b16 %v632
        %v1040 = vunpack.c.h.b16 %v632
        %v1041 = vunpack.c.l.b16 %v633
        %v1042 = vunpack.c.h.b16 %v633
        %v1043 = vunpack.c.l.b16 %v634
        %v1044 = vunpack.c.h.b16 %v634
        %v1045 = vunpack.c.l.b16 %v635
        %v1046 = vunpack.c.h.b16 %v635
        %v1047 = vunpack.c.l.b16 %v636
        %v1048 = vunpack.c.h.b16 %v636
        %v1049 = vunpack.c.l.b16 %v637
        %v1050 = vunpack.c.h.b16 %v637
        %v1051 = vunpack.c.l.b16 %v638
        %v1052 = vunpack.c.h.b16 %v638
        %v1053 = vunpack.c.l.b16 %v639
        %v1054 = vunpack.c.h.b16 %v639
        %v1055 = vunpack.c.l.b16 %v640
        %v1056 = vunpack.c.h.b16 %v640
        %v1057 = vunpack.c.l.b16 %v641
        %v1058 = vunpack.c.h.b16 %v641
        %v1059 = vunpack.c.l.b16 %v642
        %v1060 = vunpack.c.h.b16 %v642
        %v1061 = vunpack.c.l.b16 %v643
        %v1062 = vunpack.c.h.b16 %v643
        %v1063 = vunpack.c.l.b16 %v644
        %v1064 = vunpack.c.h.b16 %v644
        %v1065 = vpack.c.b16 %v813, %v809
        %v1066 = vpack.c.b16 %v814, %v810
        %v1067 = vpack.c.b16 %v815, %v811
        %v1068 = vpack.c.b16 %v816, %v812
        %v1069 = vpack.c.b16 %v821, %v817
        %v1070 = vpack.c.b16 %v822, %v818
        %v1071 = vpack.c.b16 %v823, %v819
        %v1072 = vpack.c.b16 %v824, %v820
        %v1073 = vpack.c.b16 %v829, %v825
        %v1074 = vpack.c.b16 %v830, %v826
        %v1075 = vpack.c.b16 %v831, %v827
        %v1076 = vpack.c.b16 %v832, %v828
        %v1077 = vpack.c.b16 %v837, %v833
        %v1078 = vpack.c.b16 %v838, %v834
        %v1079 = vpack.c.b16 %v839, %v835
        %v1080 = vpack.c.b16 %v840, %v836
        %v1081 = vpack.c.b16 %v845, %v841
        %v1082 = vpack.c.b16 %v846, %v842
        %v1083 = vpack.c.b16 %v847, %v843
        %v1084 = vpack.c.b16 %v848, %v844
        %v1085 = vpack.c.b16 %v853, %v849
        %v1086 = vpack.c.b16 %v854, %v850
        %v1087 = vpack.c.b16 %v855, %v851
        %v1088 = vpack.c.b16 %v856, %v852
        %v1089 = vpack.c.b16 %v861, %v857
        %v1090 = vpack.c.b16 %v862, %v858
        %v1091 = vpack.c.b16 %v863, %v859
        %v1092 = vpack.c.b16 %v864, %v860
        %v1093 = vpack.c.b16 %v869, %v865
        %v1094 = vpack.c.b16 %v870, %v866
        %v1095 = vpack.c.b16 %v871, %v867
        %v1096 = vpack.c.b16 %v872, %v868
        %v1097 = vpack.c.b16 %v877, %v873
        %v1098 = vpack.c.b16 %v878, %v874
        %v1099 = vpack.c.b16 %v879, %v875
        %v1100 = vpack.c.b16 %v880, %v876
        %v1101 = vpack.c.b16 %v885, %v881
        %v1102 = vpack.c.b16 %v886, %v882
        %v1103 = vpack.c.b16 %v887, %v883
        %v1104 = vpack.c.b16 %v888, %v884
        %v1105 = vpack.c.b16 %v893, %v889
        %v1106 = vpack.c.b16 %v894, %v890
        %v1107 = vpack.c.b16 %v895, %v891
        %v1108 = vpack.c.b16 %v896, %v892
        %v1109 = vpack.c.b16 %v901, %v897
        %v1110 = vpack.c.b16 %v902, %v898
        %v1111 = vpack.c.b16 %v903, %v899
        %v1112 = vpack.c.b16 %v904, %v900
        %v1113 = vpack.c.b16 %v909, %v905
        %v1114 = vpack.c.b16 %v910, %v906
        %v1115 = vpack.c.b16 %v911, %v907
        %v1116 = vpack.c.b16 %v912, %v908
        %v1117 = vpack.c.b16 %v917, %v913
        %v1118 = vpack.c.b16 %v918, %v914
        %v1119 = vpack.c.b16 %v919, %v915
        %v1120 = vpack.c.b16 %v920, %v916
        %v1121 = vpack.c.b16 %v925, %v921
        %v1122 = vpack.c.b16 %v926, %v922
        %v1123 = vpack.c.b16 %v927, %v923
        %v1124 = vpack.c.b16 %v928, %v924
        %v1125 = vpack.c.b16 %v933, %v929
        %v1126 = vpack.c.b16 %v934, %v930
        %v1127 = vpack.c.b16 %v935, %v931
        %v1128 = vpack.c.b16 %v936, %v932
        %v1129 = vpack.c.b16 %v941, %v937
        %v1130 = vpack.c.b16 %v942, %v938
        %v1131 = vpack.c.b16 %v943, %v939
        %v1132 = vpack.c.b16 %v944, %v940
        %v1133 = vpack.c.b16 %v949, %v945
        %v1134 = vpack.c.b16 %v950, %v946
        %v1135 = vpack.c.b16 %v951, %v947
        %v1136 = vpack.c.b16 %v952, %v948
        %v1137 = vpack.c.b16 %v957, %v953
        %v1138 = vpack.c.b16 %v958, %v954
        %v1139 = vpack.c.b16 %v959, %v955
        %v1140 = vpack.c.b16 %v960, %v956
        %v1141 = vpack.c.b16 %v965, %v961
        %v1142 = vpack.c.b16 %v966, %v962
        %v1143 = vpack.c.b16 %v967, %v963
        %v1144 = vpack.c.b16 %v968, %v964
        %v1145 = vpack.c.b16 %v973, %v969
        %v1146 = vpack.c.b16 %v974, %v970
        %v1147 = vpack.c.b16 %v975, %v971
        %v1148 = vpack.c.b16 %v976, %v972
        %v1149 = vpack.c.b16 %v981, %v977
        %v1150 = vpack.c.b16 %v982, %v978
        %v1151 = vpack.c.b16 %v983, %v979
        %v1152 = vpack.c.b16 %v984, %v980
        %v1153 = vpack.c.b16 %v989, %v985
        %v1154 = vpack.c.b16 %v990, %v986
        %v1155 = vpack.c.b16 %v991, %v987
        %v1156 = vpack.c.b16 %v992, %v988
        %v1157 = vpack.c.b16 %v997, %v993
        %v1158 = vpack.c.b16 %v998, %v994
        %v1159 = vpack.c.b16 %v999, %v995
        %v1160 = vpack.c.b16 %v1000, %v996
        %v1161 = vpack.c.b16 %v1005, %v1001
        %v1162 = vpack.c.b16 %v1006, %v1002
        %v1163 = vpack.c.b16 %v1007, %v1003
        %v1164 = vpack.c.b16 %v1008, %v1004
        %v1165 = vpack.c.b16 %v1013, %v1009
        %v1166 = vpack.c.b16 %v1014, %v1010
        %v1167 = vpack.c.b16 %v1015, %v1011
        %v1168 = vpack.c.b16 %v1016, %v1012
        %v1169 = vpack.c.b16 %v1021, %v1017
        %v1170 = vpack.c.b16 %v1022, %v1018
        %v1171 = vpack.c.b16 %v1023, %v1019
        %v1172 = vpack.c.b16 %v1024, %v1020
        %v1173 = vpack.c.b16 %v1029, %v1025
        %v1174 = vpack.c.b16 %v1030, %v1026
        %v1175 = vpack.c.b16 %v1031, %v1027
        %v1176 = vpack.c.b16 %v1032, %v1028
        %v1177 = vpack.c.b16 %v1037, %v1033
        %v1178 = vpack.c.b16 %v1038, %v1034
        %v1179 = vpack.c.b16 %v1039, %v1035
        %v1180 = vpack.c.b16 %v1040, %v1036
        %v1181 = vpack.c.b16 %v1045, %v1041
        %v1182 = vpack.c.b16 %v1046, %v1042
        %v1183 = vpack.c.b16 %v1047, %v1043
        %v1184 = vpack.c.b16 %v1048, %v1044
        %v1185 = vpack.c.b16 %v1053, %v1049
        %v1186 = vpack.c.b16 %v1054, %v1050
        %v1187 = vpack.c.b16 %v1055, %v1051
        %v1188 = vpack.c.b16 %v1056, %v1052
        %v1189 = vpack.c.b16 %v1061, %v1057
        %v1190 = vpack.c.b16 %v1062, %v1058
        %v1191 = vpack.c.b16 %v1063, %v1059
        %v1192 = vpack.c.b16 %v1064, %v1060
        %1321 = vmatprep.subr.bf16.mxu0 %v1066
        %1322 = vmatpush1.bf16.msra.mxu0 %v1065
        %1323 = vmatprep.subr.bf16.mxu0 %v1070
        %1324 = vmatpush1.bf16.msra.mxu0 %v1069
        %1325 = vmatprep.subr.bf16.mxu0 %v1074
        %1326 = vmatpush1.bf16.msra.mxu0 %v1073
        %1327 = vmatprep.subr.bf16.mxu0 %v1078
        %1328 = vmatpush1.bf16.msra.mxu0 %v1077
        %1329 = vmatprep.subr.bf16.mxu0 %v1082
        %1330 = vmatpush1.bf16.msra.mxu0 %v1081
        %1331 = vmatprep.subr.bf16.mxu0 %v1086
        %1332 = vmatpush1.bf16.msra.mxu0 %v1085
        %1333 = vmatprep.subr.bf16.mxu0 %v1090
        %1334 = vmatpush1.bf16.msra.mxu0 %v1089
        %1335 = vmatprep.subr.bf16.mxu0 %v1094
        %1336 = vmatpush1.bf16.msra.mxu0 %v1093
        %1337 = vmatprep.subr.bf16.mxu0 %v1098
        %1338 = vmatpush1.bf16.msra.mxu0 %v1097
        %1339 = vmatprep.subr.bf16.mxu0 %v1102
        %1340 = vmatpush1.bf16.msra.mxu0 %v1101
        %1341 = vmatprep.subr.bf16.mxu0 %v1106
        %1342 = vmatpush1.bf16.msra.mxu0 %v1105
        %1343 = vmatprep.subr.bf16.mxu0 %v1110
        %1344 = vmatpush1.bf16.msra.mxu0 %v1109
        %1345 = vmatprep.subr.bf16.mxu0 %v1114
        %1346 = vmatpush1.bf16.msra.mxu0 %v1113
        %1347 = vmatprep.subr.bf16.mxu0 %v1118
        %1348 = vmatpush1.bf16.msra.mxu0 %v1117
        %1349 = vmatprep.subr.bf16.mxu0 %v1122
        %1350 = vmatpush1.bf16.msra.mxu0 %v1121
        %1351 = vmatprep.subr.bf16.mxu0 %v1126
        %1352 = vmatpush1.bf16.msra.mxu0 %v1125
        %1353 = vmatprep.mubr.bf16.mxu0 %v674
        %1354 = vmatmul.mubr.bf16.gmra.mrb[0].mxu0 %v673
        %v1355 = vpop.f32.mrb[0].mxu0
        %v1356 = vadd.f32 %v650, %v1355
        %v1357 = vpop.f32.mrb[0].mxu0
        %v1358 = vadd.f32 %v654, %v1357
        %v1359 = vpop.f32.mrb[0].mxu0
        %v1360 = vpop.f32.mrb[0].mxu0
        %1361 = vdwg.mxu0
        %1362 = vmatprep.subr.bf16.mxu0 %v1130
        %1363 = vmatpush1.bf16.msra.mxu0 %v1129
        %1364 = vmatprep.subr.bf16.mxu0 %v1134
        %1365 = vmatpush1.bf16.msra.mxu0 %v1133
        %1366 = vmatprep.subr.bf16.mxu0 %v1138
        %1367 = vmatpush1.bf16.msra.mxu0 %v1137
        %1368 = vmatprep.subr.bf16.mxu0 %v1142
        %1369 = vmatpush1.bf16.msra.mxu0 %v1141
        %1370 = vmatprep.subr.bf16.mxu0 %v1146
        %1371 = vmatpush1.bf16.msra.mxu0 %v1145
        %1372 = vmatprep.subr.bf16.mxu0 %v1150
        %1373 = vmatpush1.bf16.msra.mxu0 %v1149
        %1374 = vmatprep.subr.bf16.mxu0 %v1154
        %1375 = vmatpush1.bf16.msra.mxu0 %v1153
        %1376 = vmatprep.subr.bf16.mxu0 %v1158
        %1377 = vmatpush1.bf16.msra.mxu0 %v1157
        %1378 = vmatprep.subr.bf16.mxu0 %v1162
        %1379 = vmatpush1.bf16.msra.mxu0 %v1161
        %1380 = vmatprep.subr.bf16.mxu0 %v1166
        %1381 = vmatpush1.bf16.msra.mxu0 %v1165
        %1382 = vmatprep.subr.bf16.mxu0 %v1170
        %1383 = vmatpush1.bf16.msra.mxu0 %v1169
        %1384 = vmatprep.subr.bf16.mxu0 %v1174
        %1385 = vmatpush1.bf16.msra.mxu0 %v1173
        %1386 = vmatprep.subr.bf16.mxu0 %v1178
        %1387 = vmatpush1.bf16.msra.mxu0 %v1177
        %1388 = vmatprep.subr.bf16.mxu0 %v1182
        %1389 = vmatpush1.bf16.msra.mxu0 %v1181
        %1390 = vmatprep.subr.bf16.mxu0 %v1186
        %1391 = vmatpush1.bf16.msra.mxu0 %v1185
        %1392 = vmatprep.subr.bf16.mxu0 %v1190
        %1393 = vmatpush1.bf16.msra.mxu0 %v1189
        %1394 = vmatprep.mubr.bf16.mxu0 %v676
        %1395 = vmatmul.mubr.bf16.gmra.mrb[0].mxu0 %v675
        %v1396 = vpop.f32.mrb[0].mxu0
        %v1397 = vadd.f32 %v1356, %v1396
        %v1398 = vpop.f32.mrb[0].mxu0
        %v1399 = vadd.f32 %v1358, %v1398
        %v1400 = vpop.f32.mrb[0].mxu0
        %v1401 = vpop.f32.mrb[0].mxu0
        %1402 = vdwg.mxu0
        %1403 = vmatprep.subr.bf16.mxu0 %v1068
        %1404 = vmatpush1.bf16.msra.mxu0 %v1067
        %1405 = vmatprep.subr.bf16.mxu0 %v1072
        %1406 = vmatpush1.bf16.msra.mxu0 %v1071
        %1407 = vmatprep.subr.bf16.mxu0 %v1076
        %1408 = vmatpush1.bf16.msra.mxu0 %v1075
        %1409 = vmatprep.subr.bf16.mxu0 %v1080
        %1410 = vmatpush1.bf16.msra.mxu0 %v1079
        %1411 = vmatprep.subr.bf16.mxu0 %v1084
        %1412 = vmatpush1.bf16.msra.mxu0 %v1083
        %1413 = vmatprep.subr.bf16.mxu0 %v1088
        %1414 = vmatpush1.bf16.msra.mxu0 %v1087
        %1415 = vmatprep.subr.bf16.mxu0 %v1092
        %1416 = vmatpush1.bf16.msra.mxu0 %v1091
        %1417 = vmatprep.subr.bf16.mxu0 %v1096
        %1418 = vmatpush1.bf16.msra.mxu0 %v1095
        %1419 = vmatprep.subr.bf16.mxu0 %v1100
        %1420 = vmatpush1.bf16.msra.mxu0 %v1099
        %1421 = vmatprep.subr.bf16.mxu0 %v1104
        %1422 = vmatpush1.bf16.msra.mxu0 %v1103
        %1423 = vmatprep.subr.bf16.mxu0 %v1108
        %1424 = vmatpush1.bf16.msra.mxu0 %v1107
        %1425 = vmatprep.subr.bf16.mxu0 %v1112
        %1426 = vmatpush1.bf16.msra.mxu0 %v1111
        %1427 = vmatprep.subr.bf16.mxu0 %v1116
        %1428 = vmatpush1.bf16.msra.mxu0 %v1115
        %1429 = vmatprep.subr.bf16.mxu0 %v1120
        %1430 = vmatpush1.bf16.msra.mxu0 %v1119
        %1431 = vmatprep.subr.bf16.mxu0 %v1124
        %1432 = vmatpush1.bf16.msra.mxu0 %v1123
        %1433 = vmatprep.subr.bf16.mxu0 %v1128
        %1434 = vmatpush1.bf16.msra.mxu0 %v1127
        %1435 = vmatprep.mubr.bf16.mxu0 %v674
        %1436 = vmatmul.mubr.bf16.gmra.mrb[0].mxu0 %v673
        %v1437 = vpop.f32.mrb[0].mxu0
        %v1438 = vadd.f32 %v658, %v1437
        %v1439 = vpop.f32.mrb[0].mxu0
        %v1440 = vadd.f32 %v662, %v1439
        %v1441 = vpop.f32.mrb[0].mxu0
        %v1442 = vpop.f32.mrb[0].mxu0
        %1443 = vdwg.mxu0
        %1444 = vmatprep.subr.bf16.mxu0 %v1132
        %1445 = vmatpush1.bf16.msra.mxu0 %v1131
        %1446 = vmatprep.subr.bf16.mxu0 %v1136
        %1447 = vmatpush1.bf16.msra.mxu0 %v1135
        %1448 = vmatprep.subr.bf16.mxu0 %v1140
        %1449 = vmatpush1.bf16.msra.mxu0 %v1139
        %1450 = vmatprep.subr.bf16.mxu0 %v1144
        %1451 = vmatpush1.bf16.msra.mxu0 %v1143
        %1452 = vmatprep.subr.bf16.mxu0 %v1148
        %1453 = vmatpush1.bf16.msra.mxu0 %v1147
        %1454 = vmatprep.subr.bf16.mxu0 %v1152
        %1455 = vmatpush1.bf16.msra.mxu0 %v1151
        %1456 = vmatprep.subr.bf16.mxu0 %v1156
        %1457 = vmatpush1.bf16.msra.mxu0 %v1155
        %1458 = vmatprep.subr.bf16.mxu0 %v1160
        %1459 = vmatpush1.bf16.msra.mxu0 %v1159
        %1460 = vmatprep.subr.bf16.mxu0 %v1164
        %1461 = vmatpush1.bf16.msra.mxu0 %v1163
        %1462 = vmatprep.subr.bf16.mxu0 %v1168
        %1463 = vmatpush1.bf16.msra.mxu0 %v1167
        %1464 = vmatprep.subr.bf16.mxu0 %v1172
        %1465 = vmatpush1.bf16.msra.mxu0 %v1171
        %1466 = vmatprep.subr.bf16.mxu0 %v1176
        %1467 = vmatpush1.bf16.msra.mxu0 %v1175
        %1468 = vmatprep.subr.bf16.mxu0 %v1180
        %1469 = vmatpush1.bf16.msra.mxu0 %v1179
        %1470 = vmatprep.subr.bf16.mxu0 %v1184
        %1471 = vmatpush1.bf16.msra.mxu0 %v1183
        %1472 = vmatprep.subr.bf16.mxu0 %v1188
        %1473 = vmatpush1.bf16.msra.mxu0 %v1187
        %1474 = vmatprep.subr.bf16.mxu0 %v1192
        %1475 = vmatpush1.bf16.msra.mxu0 %v1191
        %1476 = vmatprep.mubr.bf16.mxu0 %v676
        %1477 = vmatmul.mubr.bf16.gmra.mrb[0].mxu0 %v675
        %v1478 = vpop.f32.mrb[0].mxu0
        %v1479 = vadd.f32 %v1438, %v1478
        %v1480 = vpop.f32.mrb[0].mxu0
        %v1481 = vadd.f32 %v1440, %v1480
        %v1482 = vpop.f32.mrb[0].mxu0
        %v1483 = vpop.f32.mrb[0].mxu0
        %1484 = vdwg.mxu0
        %v1485 = vmax.f32 %v1397, 0.0
        %v1486 = vmax.f32 %v1399, 0.0
        %v1487 = vmax.f32 %v1479, 0.0
        %v1488 = vmax.f32 %v1481, 0.0
        %v1489 = vpack.c.bf16 %v1485, %v1485
        %v1490 = vpack.c.bf16 %v1486, %v1486
        %v1491 = vpack.c.bf16 %v1487, %v1487
        %v1492 = vpack.c.bf16 %v1488, %v1488
        %v1497 = vunpack.c.l.b16 %v1489
        %v1498 = vunpack.c.l.b16 %v1490
        %v1499 = vunpack.c.l.b16 %v1491
        %v1500 = vunpack.c.l.b16 %v1492
        %v1501 = vpack.c.b16 %v1498, %v1497
        %v1502 = vpack.c.b16 %v1500, %v1499
        %1505 = vst [vmem:[#allocation2] sm:$0xff] %v1501
        %1506 = vst [vmem:[#allocation2 + $0x8] sm:$0xff] %v1502
        %p1507 = scmp.eq.s32.totalorder %s20, 6
        // Predicated region
        $region73: #{backward_model_forward.1} parent=47 // pred_check
          %p1508 = pneg %p1507
        $region74: #{backward_model_forward.1} parent=47 // pred_check_branch
          %1510 = sbr.rel (%p1508) target = $region76
        $region75: #{backward_model_forward.1} parent=47 // pred_region
          %v1511 = vld [vmem:[#allocation2] sm:$0xff]
          %v1512 = vld [vmem:[#allocation2 + $0x8] sm:$0xff]
          %v1513 = vld [vmem:[%s5] sm:$0xf]
          %v1514 = vld [vmem:[%s5 + $0x4] sm:$0xf]
          %v1515 = vld [vmem:[%s5 + $0x8] sm:$0xf]
          %v1516 = vld [vmem:[%s5 + $0xc] sm:$0xf]
          %v1517 = vld [vmem:[%s5 + $0x10] sm:$0xf]
          %v1518 = vld [vmem:[%s5 + $0x14] sm:$0xf]
          %v1519 = vld [vmem:[%s5 + $0x18] sm:$0xf]
          %v1520 = vld [vmem:[%s5 + $0x1c] sm:$0xf]
          %v1521 = vld [vmem:[%s5 + $0x20] sm:$0xf]
          %v1522 = vld [vmem:[%s5 + $0x24] sm:$0xf]
          %v1523 = vld [vmem:[%s5 + $0x28] sm:$0xf]
          %v1524 = vld [vmem:[%s5 + $0x2c] sm:$0xf]
          %v1525 = vld [vmem:[%s5 + $0x30] sm:$0xf]
          %v1526 = vld [vmem:[%s5 + $0x34] sm:$0xf]
          %v1527 = vld [vmem:[%s5 + $0x38] sm:$0xf]
          %v1528 = vld [vmem:[%s5 + $0x3c] sm:$0xf]
          %v1529 = vld [vmem:[%s5 + $0x40] sm:$0xf]
          %v1530 = vld [vmem:[%s5 + $0x44] sm:$0xf]
          %v1531 = vld [vmem:[%s5 + $0x48] sm:$0xf]
          %v1532 = vld [vmem:[%s5 + $0x4c] sm:$0xf]
          %v1533 = vld [vmem:[%s5 + $0x50] sm:$0xf]
          %v1534 = vld [vmem:[%s5 + $0x54] sm:$0xf]
          %v1535 = vld [vmem:[%s5 + $0x58] sm:$0xf]
          %v1536 = vld [vmem:[%s5 + $0x5c] sm:$0xf]
          %v1537 = vld [vmem:[%s5 + $0x60] sm:$0xf]
          %v1538 = vld [vmem:[%s5 + $0x64] sm:$0xf]
          %v1539 = vld [vmem:[%s5 + $0x68] sm:$0xf]
          %v1540 = vld [vmem:[%s5 + $0x6c] sm:$0xf]
          %v1541 = vld [vmem:[%s5 + $0x70] sm:$0xf]
          %v1542 = vld [vmem:[%s5 + $0x74] sm:$0xf]
          %v1543 = vld [vmem:[%s5 + $0x78] sm:$0xf]
          %v1544 = vld [vmem:[%s5 + $0x7c] sm:$0xf]
          %v1545 = vld [vmem:[%s5 + $0x80] sm:$0xf]
          %v1546 = vld [vmem:[%s5 + $0x84] sm:$0xf]
          %v1547 = vld [vmem:[%s5 + $0x88] sm:$0xf]
          %v1548 = vld [vmem:[%s5 + $0x8c] sm:$0xf]
          %v1549 = vld [vmem:[%s5 + $0x90] sm:$0xf]
          %v1550 = vld [vmem:[%s5 + $0x94] sm:$0xf]
          %v1551 = vld [vmem:[%s5 + $0x98] sm:$0xf]
          %v1552 = vld [vmem:[%s5 + $0x9c] sm:$0xf]
          %v1553 = vld [vmem:[%s5 + $0xa0] sm:$0xf]
          %v1554 = vld [vmem:[%s5 + $0xa4] sm:$0xf]
          %v1555 = vld [vmem:[%s5 + $0xa8] sm:$0xf]
          %v1556 = vld [vmem:[%s5 + $0xac] sm:$0xf]
          %v1557 = vld [vmem:[%s5 + $0xb0] sm:$0xf]
          %v1558 = vld [vmem:[%s5 + $0xb4] sm:$0xf]
          %v1559 = vld [vmem:[%s5 + $0xb8] sm:$0xf]
          %v1560 = vld [vmem:[%s5 + $0xbc] sm:$0xf]
          %v1561 = vld [vmem:[%s5 + $0xc0] sm:$0xf]
          %v1562 = vld [vmem:[%s5 + $0xc4] sm:$0xf]
          %v1563 = vld [vmem:[%s5 + $0xc8] sm:$0xf]
          %v1564 = vld [vmem:[%s5 + $0xcc] sm:$0xf]
          %v1565 = vld [vmem:[%s5 + $0xd0] sm:$0xf]
          %v1566 = vld [vmem:[%s5 + $0xd4] sm:$0xf]
          %v1567 = vld [vmem:[%s5 + $0xd8] sm:$0xf]
          %v1568 = vld [vmem:[%s5 + $0xdc] sm:$0xf]
          %v1569 = vld [vmem:[%s5 + $0xe0] sm:$0xf]
          %v1570 = vld [vmem:[%s5 + $0xe4] sm:$0xf]
          %v1571 = vld [vmem:[%s5 + $0xe8] sm:$0xf]
          %v1572 = vld [vmem:[%s5 + $0xec] sm:$0xf]
          %v1573 = vld [vmem:[%s5 + $0xf0] sm:$0xf]
          %v1574 = vld [vmem:[%s5 + $0xf4] sm:$0xf]
          %v1575 = vld [vmem:[%s5 + $0xf8] sm:$0xf]
          %v1576 = vld [vmem:[%s5 + $0xfc] sm:$0xf]
          %v1577 = vld [vmem:[#allocation9] sm:$0x1]
          %v1579 = vlaneseq
          %v1580 = vshrl.u32 %v1579, 7
          %v1581 = vsub.s32 0, %v1580
          %v1582 = vrot.slane %v1577, %v1581
          %v1586 = vunpack.c.l.b16 %v1511
          %v1587 = vunpack.c.h.b16 %v1511
          %v1588 = vunpack.c.l.b16 %v1512
          %v1589 = vunpack.c.h.b16 %v1512
          %v1590 = vpack.c.b16 %v1586, %v1586
          %v1591 = vpack.c.b16 %v1587, %v1587
          %v1592 = vpack.c.b16 %v1588, %v1588
          %v1593 = vpack.c.b16 %v1589, %v1589
          %v1662 = vunpack.c.l.b16 %v1513
          %v1663 = vunpack.c.l.b16 %v1514
          %v1664 = vunpack.c.l.b16 %v1515
          %v1665 = vunpack.c.l.b16 %v1516
          %v1666 = vunpack.c.l.b16 %v1517
          %v1667 = vunpack.c.l.b16 %v1518
          %v1668 = vunpack.c.l.b16 %v1519
          %v1669 = vunpack.c.l.b16 %v1520
          %v1670 = vunpack.c.l.b16 %v1521
          %v1671 = vunpack.c.l.b16 %v1522
          %v1672 = vunpack.c.l.b16 %v1523
          %v1673 = vunpack.c.l.b16 %v1524
          %v1674 = vunpack.c.l.b16 %v1525
          %v1675 = vunpack.c.l.b16 %v1526
          %v1676 = vunpack.c.l.b16 %v1527
          %v1677 = vunpack.c.l.b16 %v1528
          %v1678 = vunpack.c.l.b16 %v1529
          %v1679 = vunpack.c.l.b16 %v1530
          %v1680 = vunpack.c.l.b16 %v1531
          %v1681 = vunpack.c.l.b16 %v1532
          %v1682 = vunpack.c.l.b16 %v1533
          %v1683 = vunpack.c.l.b16 %v1534
          %v1684 = vunpack.c.l.b16 %v1535
          %v1685 = vunpack.c.l.b16 %v1536
          %v1686 = vunpack.c.l.b16 %v1537
          %v1687 = vunpack.c.l.b16 %v1538
          %v1688 = vunpack.c.l.b16 %v1539
          %v1689 = vunpack.c.l.b16 %v1540
          %v1690 = vunpack.c.l.b16 %v1541
          %v1691 = vunpack.c.l.b16 %v1542
          %v1692 = vunpack.c.l.b16 %v1543
          %v1693 = vunpack.c.l.b16 %v1544
          %v1694 = vunpack.c.l.b16 %v1545
          %v1695 = vunpack.c.l.b16 %v1546
          %v1696 = vunpack.c.l.b16 %v1547
          %v1697 = vunpack.c.l.b16 %v1548
          %v1698 = vunpack.c.l.b16 %v1549
          %v1699 = vunpack.c.l.b16 %v1550
          %v1700 = vunpack.c.l.b16 %v1551
          %v1701 = vunpack.c.l.b16 %v1552
          %v1702 = vunpack.c.l.b16 %v1553
          %v1703 = vunpack.c.l.b16 %v1554
          %v1704 = vunpack.c.l.b16 %v1555
          %v1705 = vunpack.c.l.b16 %v1556
          %v1706 = vunpack.c.l.b16 %v1557
          %v1707 = vunpack.c.l.b16 %v1558
          %v1708 = vunpack.c.l.b16 %v1559
          %v1709 = vunpack.c.l.b16 %v1560
          %v1710 = vunpack.c.l.b16 %v1561
          %v1711 = vunpack.c.l.b16 %v1562
          %v1712 = vunpack.c.l.b16 %v1563
          %v1713 = vunpack.c.l.b16 %v1564
          %v1714 = vunpack.c.l.b16 %v1565
          %v1715 = vunpack.c.l.b16 %v1566
          %v1716 = vunpack.c.l.b16 %v1567
          %v1717 = vunpack.c.l.b16 %v1568
          %v1718 = vunpack.c.l.b16 %v1569
          %v1719 = vunpack.c.l.b16 %v1570
          %v1720 = vunpack.c.l.b16 %v1571
          %v1721 = vunpack.c.l.b16 %v1572
          %v1722 = vunpack.c.l.b16 %v1573
          %v1723 = vunpack.c.l.b16 %v1574
          %v1724 = vunpack.c.l.b16 %v1575
          %v1725 = vunpack.c.l.b16 %v1576
          %v1726 = vpack.c.b16 %v1663, %v1662
          %v1727 = vpack.c.b16 %v1665, %v1664
          %v1728 = vpack.c.b16 %v1667, %v1666
          %v1729 = vpack.c.b16 %v1669, %v1668
          %v1730 = vpack.c.b16 %v1671, %v1670
          %v1731 = vpack.c.b16 %v1673, %v1672
          %v1732 = vpack.c.b16 %v1675, %v1674
          %v1733 = vpack.c.b16 %v1677, %v1676
          %v1734 = vpack.c.b16 %v1679, %v1678
          %v1735 = vpack.c.b16 %v1681, %v1680
          %v1736 = vpack.c.b16 %v1683, %v1682
          %v1737 = vpack.c.b16 %v1685, %v1684
          %v1738 = vpack.c.b16 %v1687, %v1686
          %v1739 = vpack.c.b16 %v1689, %v1688
          %v1740 = vpack.c.b16 %v1691, %v1690
          %v1741 = vpack.c.b16 %v1693, %v1692
          %v1742 = vpack.c.b16 %v1695, %v1694
          %v1743 = vpack.c.b16 %v1697, %v1696
          %v1744 = vpack.c.b16 %v1699, %v1698
          %v1745 = vpack.c.b16 %v1701, %v1700
          %v1746 = vpack.c.b16 %v1703, %v1702
          %v1747 = vpack.c.b16 %v1705, %v1704
          %v1748 = vpack.c.b16 %v1707, %v1706
          %v1749 = vpack.c.b16 %v1709, %v1708
          %v1750 = vpack.c.b16 %v1711, %v1710
          %v1751 = vpack.c.b16 %v1713, %v1712
          %v1752 = vpack.c.b16 %v1715, %v1714
          %v1753 = vpack.c.b16 %v1717, %v1716
          %v1754 = vpack.c.b16 %v1719, %v1718
          %v1755 = vpack.c.b16 %v1721, %v1720
          %v1756 = vpack.c.b16 %v1723, %v1722
          %v1757 = vpack.c.b16 %v1725, %v1724
          %1790 = vmatprep.subr.bf16.mxu0 0
          %1791 = vmatpush1.bf16.msra.mxu0 %v1726
          %1792 = vmatprep.subr.bf16.mxu0 0
          %1793 = vmatpush1.bf16.msra.mxu0 %v1727
          %1794 = vmatprep.subr.bf16.mxu0 0
          %1795 = vmatpush1.bf16.msra.mxu0 %v1728
          %1796 = vmatprep.subr.bf16.mxu0 0
          %1797 = vmatpush1.bf16.msra.mxu0 %v1729
          %1798 = vmatprep.subr.bf16.mxu0 0
          %1799 = vmatpush1.bf16.msra.mxu0 %v1730
          %1800 = vmatprep.subr.bf16.mxu0 0
          %1801 = vmatpush1.bf16.msra.mxu0 %v1731
          %1802 = vmatprep.subr.bf16.mxu0 0
          %1803 = vmatpush1.bf16.msra.mxu0 %v1732
          %1804 = vmatprep.subr.bf16.mxu0 0
          %1805 = vmatpush1.bf16.msra.mxu0 %v1733
          %1806 = vmatprep.subr.bf16.mxu0 0
          %1807 = vmatpush1.bf16.msra.mxu0 %v1734
          %1808 = vmatprep.subr.bf16.mxu0 0
          %1809 = vmatpush1.bf16.msra.mxu0 %v1735
          %1810 = vmatprep.subr.bf16.mxu0 0
          %1811 = vmatpush1.bf16.msra.mxu0 %v1736
          %1812 = vmatprep.subr.bf16.mxu0 0
          %1813 = vmatpush1.bf16.msra.mxu0 %v1737
          %1814 = vmatprep.subr.bf16.mxu0 0
          %1815 = vmatpush1.bf16.msra.mxu0 %v1738
          %1816 = vmatprep.subr.bf16.mxu0 0
          %1817 = vmatpush1.bf16.msra.mxu0 %v1739
          %1818 = vmatprep.subr.bf16.mxu0 0
          %1819 = vmatpush1.bf16.msra.mxu0 %v1740
          %1820 = vmatprep.subr.bf16.mxu0 0
          %1821 = vmatpush1.bf16.msra.mxu0 %v1741
          %1822 = vmatprep.mubr.bf16.mxu0 %v1591
          %1823 = vmatmul.mubr.bf16.gmra.mrb[0].mxu0 %v1590
          %v1824 = vpop.f32.mrb[0].mxu0
          %v1825 = vadd.f32 %v1582, %v1824
          %v1826 = vpop.f32.mrb[0].mxu0
          %v1827 = vpop.f32.mrb[0].mxu0
          %v1828 = vpop.f32.mrb[0].mxu0
          %1829 = vdwg.mxu0
          %1830 = vmatprep.subr.bf16.mxu0 0
          %1831 = vmatpush1.bf16.msra.mxu0 %v1742
          %1832 = vmatprep.subr.bf16.mxu0 0
          %1833 = vmatpush1.bf16.msra.mxu0 %v1743
          %1834 = vmatprep.subr.bf16.mxu0 0
          %1835 = vmatpush1.bf16.msra.mxu0 %v1744
          %1836 = vmatprep.subr.bf16.mxu0 0
          %1837 = vmatpush1.bf16.msra.mxu0 %v1745
          %1838 = vmatprep.subr.bf16.mxu0 0
          %1839 = vmatpush1.bf16.msra.mxu0 %v1746
          %1840 = vmatprep.subr.bf16.mxu0 0
          %1841 = vmatpush1.bf16.msra.mxu0 %v1747
          %1842 = vmatprep.subr.bf16.mxu0 0
          %1843 = vmatpush1.bf16.msra.mxu0 %v1748
          %1844 = vmatprep.subr.bf16.mxu0 0
          %1845 = vmatpush1.bf16.msra.mxu0 %v1749
          %1846 = vmatprep.subr.bf16.mxu0 0
          %1847 = vmatpush1.bf16.msra.mxu0 %v1750
          %1848 = vmatprep.subr.bf16.mxu0 0
          %1849 = vmatpush1.bf16.msra.mxu0 %v1751
          %1850 = vmatprep.subr.bf16.mxu0 0
          %1851 = vmatpush1.bf16.msra.mxu0 %v1752
          %1852 = vmatprep.subr.bf16.mxu0 0
          %1853 = vmatpush1.bf16.msra.mxu0 %v1753
          %1854 = vmatprep.subr.bf16.mxu0 0
          %1855 = vmatpush1.bf16.msra.mxu0 %v1754
          %1856 = vmatprep.subr.bf16.mxu0 0
          %1857 = vmatpush1.bf16.msra.mxu0 %v1755
          %1858 = vmatprep.subr.bf16.mxu0 0
          %1859 = vmatpush1.bf16.msra.mxu0 %v1756
          %1860 = vmatprep.subr.bf16.mxu0 0
          %1861 = vmatpush1.bf16.msra.mxu0 %v1757
          %1862 = vmatprep.mubr.bf16.mxu0 %v1593
          %1863 = vmatmul.mubr.bf16.gmra.mrb[0].mxu0 %v1592
          %v1864 = vpop.f32.mrb[0].mxu0
          %v1865 = vadd.f32 %v1825, %v1864
          %v1866 = vpop.f32.mrb[0].mxu0
          %v1867 = vpop.f32.mrb[0].mxu0
          %v1868 = vpop.f32.mrb[0].mxu0
          %1869 = vdwg.mxu0
          %vm1870 = vcmask 31744
          %1871 = vst.msk [vmem:[%s7] sm:$0xff] %vm1870, %v1865
        $region76: #{backward_model_forward.1} parent=47 // pred_fallthru
          _
        // Predicated region
        $region77: #{backward_model_forward.1} parent=47 // pred_check
          %p1872 = pneg %p190
        $region78: #{backward_model_forward.1} parent=47 // pred_check_branch
          %1874 = sbr.rel (%p1872) target = $region80
        $region79: #{backward_model_forward.1} parent=47 // pred_region
          _
        $region80: #{backward_model_forward.1} parent=47 // pred_fallthru
          _
        // Predicated region
        $region81: #{backward_model_forward.1} parent=47 // pred_check
          %p1875 = pneg %p190
        $region82: #{backward_model_forward.1} parent=47 // pred_check_branch
          %1877 = sbr.rel (%p1875) target = $region84
        $region83: #{backward_model_forward.1} parent=47 // pred_region
          _
        $region84: #{backward_model_forward.1} parent=47 // pred_fallthru
          _
      $region48: #{backward_model_forward.1} parent=5 // pred_fallthru
        _
      %p1878 = scmp.le.s32.totalorder 2, %s15
      // Predicated region
      $region85: #{backward_model_forward.1} parent=5 // pred_check
        %p1879 = pneg %p1878
      $region86: #{backward_model_forward.1} parent=5 // pred_check_branch
        %1881 = sbr.rel (%p1879) target = $region88
      $region87: #{backward_model_forward.1} parent=5 // pred_region
        %s1882 = ssub.s32 %s15, 2
      $region88: #{backward_model_forward.1} parent=5 // pred_fallthru
        _
    $region6: #{backward_model_forward.1} parent=1 // loop_footer
      %s19 = sadd.s32 1, %s15
    $region7: #{backward_model_forward.1} parent=1 // loop_footer_branch
      %14 = sbr.rel target = $region3
    $region8: #{backward_model_forward.1} parent=1 // loop_exit
      _
    %1883 = vsyncpa [#allocation4], 1
    %s1884 = scalar_lea.sflag [#allocation4], 1
    %1885 = vsyncpa %s1884, 1
    %1886 = vsyncpa [#allocation6], 1

</llo_original>
